<compile_context>
chip_gen: v6e
topology: v6e:2x2x1
jax: 0.10.0
libtpu: 0.0.40
codegen_flags: <defaults>
</compile_context>

<pallas_src>
import functools

import jax
import jax.numpy as jnp
from jax.experimental import pallas as pl
from jax.experimental.pallas import tpu as pltpu

LRELU_SLOPE = 0.2
BN_EPS = 1e-5
# VMEM is never the binding constraint here (worst per-step footprint < 1 MiB);
# 32 MiB is a comfortable explicit budget on every generation (v7x has 64 MiB).
VMEM_LIMIT_BYTES = 32 * 1024 * 1024


def _round_up(x, m):
    return (x + m - 1) // m * m


def _multi_tensorcore():
    """True on chips that expose 2 TensorCores behind one device (v7x / v4)."""
    try:
        kind = jax.devices()[0].device_kind.lower()
    except Exception:
        return False
    return any(tag in kind for tag in ("v7", "7x", "v4"))


_MULTI_TC = _multi_tensorcore()


def _choose_tile_m(m):
    """Lane-side tile for the flattened M = N*Ho*Wo axis (multiple of 128).

    Single-TC chips (v5e/v6e): one full-slab tile per layer -- extra grid steps
    only add per-step overhead.  2-TC chips (v7x): keep >=2 'parallel' grid
    steps when there is enough work to split across both TensorCores.
    """
    m128 = _round_up(m, 128)
    if not _MULTI_TC or m128 < 256:
        return m128
    if m128 >= 1024:
        return 512
    return _round_up(m128 // 2, 128)


# ----------------------------- Pallas kernel -------------------------------- #

def _gemm_kernel(p_ref, w_ref, o_ref):
    """One (Cout, TM) output tile of W @ patches.

    p_ref : (K, TM)    bf16 im2col patches (M on the 128-lane axis).
    w_ref : (Cout, K)  bf16 GEMM-ready conv weight.
    o_ref : (Cout, TM) f32 raw conv output tile (f32 MXU accumulation).
    """
    o_ref[...] = jnp.dot(w_ref[...], p_ref[...],
                         preferred_element_type=jnp.float32)


# ----------------------------- conv wrapper --------------------------------- #

def conv4x4_s2(act_bf16, w2):
    """Conv2d(kernel=4, stride=2, padding=1, bias=False) as a lane-dense GEMM.

    act_bf16 : (Cin, N, H, W) bf16 channels-major activation (already
               BN-folded / LeakyReLU'd by the caller), unpadded.
    w2       : (Cout, Cin*16) bf16, K ordered (cin, kh, kw) == torch reshape.

    Returns (raw, meta):
      raw  : (Cout, M_pad) f32 un-normalized conv output, M on lanes.
      meta : (N, Ho, Wo, M).
    """
    Cin, N, H, W = act_bf16.shape
    Cout, K = w2.shape
    Ho, Wo = H // 2, W // 2
    M = N * Ho * Wo

    # im2col gather in bf16 (plain-XLA glue).  K index = cin*16 + kh*4 + kw
    # matches the PyTorch weight reshape; M index ordering is (n, ho, wo).
    ap = jnp.pad(act_bf16, ((0, 0), (0, 0), (1, 1), (1, 1)))
    cols = [ap[:, :, kh:kh + 2 * Ho:2, kw:kw + 2 * Wo:2]
            for kh in range(4) for kw in range(4)]
    patches = jnp.stack(cols, axis=1).reshape(K, M)        # (Cin*16, M) bf16

    TM = _choose_tile_m(M)
    M_pad = _round_up(M, TM)
    if M_pad != M:
        # Zero columns are exact: conv(0) = 0 (no bias) and the padded columns
        # are sliced away before any BN statistics are taken.
        patches = jnp.pad(patches, ((0, 0), (0, M_pad - M)))
    n_tiles = M_pad // TM

    raw = pl.pallas_call(
        _gemm_kernel,
        out_shape=jax.ShapeDtypeStruct((Cout, M_pad), jnp.float32),
        grid=(n_tiles,),
        in_specs=[pl.BlockSpec((K, TM), lambda j: (0, j)),
                  pl.BlockSpec((Cout, K), lambda j: (0, 0))],
        out_specs=pl.BlockSpec((Cout, TM), lambda j: (0, j)),
        compiler_params=pltpu.CompilerParams(
            dimension_semantics=("parallel",),
            vmem_limit_bytes=VMEM_LIMIT_BYTES),
    )(patches, w2)
    return raw, (N, Ho, Wo, M)


# ----------------------------- BatchNorm fold -------------------------------- #

def bn_scale_shift(raw, m_true, gamma, beta):
    """Training-mode batch stats -> per-channel (scale, shift), two-pass f32."""
    m = raw[:, :m_true]
    mean = jnp.mean(m, axis=1)
    var = jnp.mean(jnp.square(m - mean[:, None]), axis=1)   # biased (PyTorch)
    inv = jax.lax.rsqrt(var + BN_EPS)
    scale = gamma * inv
    shift = beta - mean * scale
    return scale, shift


# ----------------------------- parameters ----------------------------------- #

def init_params(key, in_channels, num_downs, ngf):
    names = (['top', 'enc1', 'enc2', 'enc3']
             + [f'inter{i}' for i in range(num_downs - 5)]
             + ['last'])
    chans = ([(in_channels, ngf), (ngf, ngf * 2), (ngf * 2, ngf * 4),
              (ngf * 4, ngf * 8)]
             + [(ngf * 8, ngf * 8)] * (num_downs - 5)
             + [(ngf * 8, ngf * 8)])
    params = {}
    keys = jax.random.split(key, len(names))
    for name, (cin, cout), k in zip(names, chans, keys):
        # PyTorch layout (Cout, Cin, 4, 4) -> GEMM-ready (Cout, Cin*16) bf16,
        # reordered once here (no per-layer weight transform in the forward).
        w = 0.02 * jax.random.normal(k, (cout, cin, 4, 4), jnp.float32)
        params[name + '_w'] = w.reshape(cout, cin * 16).astype(jnp.bfloat16)
        if name not in ('top', 'last'):                   # DownBlocks carry BN
            params[name + '_gamma'] = jnp.ones((cout,), jnp.float32)
            params[name + '_beta'] = jnp.zeros((cout,), jnp.float32)
    return params, names


# ----------------------------- forward pass ---------------------------------- #

def _lrelu(x):
    return jnp.where(x >= 0, x, LRELU_SLOPE * x)


def encoder_forward(x, params, names):
    outs = []

    # top_layer: Conv only (no activation, no norm).
    a = jnp.transpose(x, (1, 0, 2, 3)).astype(jnp.bfloat16)     # (C, N, H, W)
    raw, (N, Ho, Wo, M) = conv4x4_s2(a, params['top_w'])
    cur = raw[:, :M].reshape(raw.shape[0], N, Ho, Wo)           # channels-major f32
    outs.append(jnp.transpose(cur, (1, 0, 2, 3)))               # e1 (NCHW)

    # DownBlocks: LeakyReLU(0.2) -> Conv -> BatchNorm (training-mode stats).
    # BN scale/shift is folded into the XLA epilogue/prologue (no extra kernel).
    for name in names[1:-1]:
        act = _lrelu(cur).astype(jnp.bfloat16)                  # f32 LReLU, bf16 cast
        raw, (N, Ho, Wo, M) = conv4x4_s2(act, params[name + '_w'])
        scale, shift = bn_scale_shift(raw, M,
                                      params[name + '_gamma'],
                                      params[name + '_beta'])
        norm = raw[:, :M] * scale[:, None] + shift[:, None]
        cur = norm.reshape(norm.shape[0], N, Ho, Wo)
        outs.append(jnp.transpose(cur, (1, 0, 2, 3)))           # e2, e3, e4, inter_*

    # last_encode_layer: LeakyReLU(0.2) -> Conv.
    act = _lrelu(cur).astype(jnp.bfloat16)
    raw, (N, Ho, Wo, M) = conv4x4_s2(act, params['last_w'])
    outs.append(jnp.transpose(raw[:, :M].reshape(raw.shape[0], N, Ho, Wo),
                              (1, 0, 2, 3)))                    # final_out
    return outs
    # TODO(synk): training-time BatchNorm running-stats buffer updates are a
    # module side effect and are not part of the returned forward values.


# ----------------------------- reference (plain JAX) ------------------------- #

def reference_forward(x, params, names):
    """f32 NCHW reference using the same bf16-quantized weights."""
    def conv(h, w2):
        cout, k = w2.shape
        w4 = w2.astype(jnp.float32).reshape(cout, k // 16, 4, 4)
        return jax.lax.conv_general_dilated(
            h, w4, window_strides=(2, 2), padding=((1, 1), (1, 1)),
            dimension_numbers=('NCHW', 'OIHW', 'NCHW'))

    def bn(h, g, b):
        mean = jnp.mean(h, axis=(0, 2, 3), keepdims=True)
        var = jnp.mean((h - mean) ** 2, axis=(0, 2, 3), keepdims=True)
        return ((h - mean) * jax.lax.rsqrt(var + BN_EPS)
                * g.reshape(1, -1, 1, 1) + b.reshape(1, -1, 1, 1))

    outs = []
    h = conv(x, params['top_w'])
    outs.append(h)
    for name in names[1:-1]:
        h = bn(conv(_lrelu(h), params[name + '_w']),
               params[name + '_gamma'], params[name + '_beta'])
        outs.append(h)
    outs.append(conv(_lrelu(h), params['last_w']))
    return outs


# ----------------------------- main ------------------------------------------ #

if __name__ == "__main__":
    in_channels, num_downs, ngf = 4, 6, 8      # num_downs >= 6 required by the module
    N, H, W = 2, 64, 64                        # spatial must survive 6 halvings

    key = jax.random.PRNGKey(0)
    kx, kp = jax.random.split(key)
    x = jax.random.normal(kx, (N, in_channels, H, W), jnp.float32)
    params, names = init_params(kp, in_channels, num_downs, ngf)

    fwd = jax.jit(functools.partial(encoder_forward, names=names))
    outs = jax.block_until_ready(fwd(x, params))

    expected = [(N, ngf, 32, 32), (N, ngf * 2, 16, 16), (N, ngf * 4, 8, 8),
                (N, ngf * 8, 4, 4), (N, ngf * 8, 2, 2), (N, ngf * 8, 1, 1)]
    assert [tuple(o.shape) for o in outs] == expected, \
        f"shape mismatch: {[o.shape for o in outs]}"
    assert all(bool(jnp.all(jnp.isfinite(o))) for o in outs)

    # Numerical check vs a plain-JAX f32 reference.  Tolerance is loose because
    # the Pallas path feeds bf16 activations to the MXU (f32 accumulation).
    refs = jax.jit(functools.partial(reference_forward, names=names))(x, params)
    for o, r in zip(outs, refs):
        max_err = float(jnp.max(jnp.abs(o - r)))
        assert jnp.allclose(o, r, rtol=0.1, atol=0.1), f"max abs err {max_err}"

    print("KERNEL_OK")
</pallas_src>

<mosaic_0001>
module attributes {stable_mosaic.version = 11 : i64} {
  func.func @_gemm_kernel(%arg0: i32, %arg1: memref<64x2048xbf16, #tpu.memory_space<vmem>>, %arg2: memref<8x64xbf16, #tpu.memory_space<vmem>>, %arg3: memref<8x2048xf32, #tpu.memory_space<vmem>>) attributes {dimension_semantics = [#tpu.dimension_semantics<parallel>], iteration_bounds = array<i64: 1>, scalar_prefetch = 0 : i64, scratch_operands = 0 : i64, tpu.core_type = #tpu.core_type<tc>, window_params = [{transform_indices = @transform_0, window_bounds = array<i64: 64, 2048>}, {pipeline_mode = #tpu.pipeline_mode<synchronous>, transform_indices = @transform_1, window_bounds = array<i64: 8, 64>}, {transform_indices = @transform_2, window_bounds = array<i64: 8, 2048>}]} {
    %c0 = arith.constant 0 : index
    %c0_0 = arith.constant 0 : index
    %0 = vector.load %arg2[%c0, %c0_0] : memref<8x64xbf16, #tpu.memory_space<vmem>>, vector<8x64xbf16>
    %c0_1 = arith.constant 0 : index
    %c0_2 = arith.constant 0 : index
    %1 = vector.load %arg1[%c0_1, %c0_2] : memref<64x2048xbf16, #tpu.memory_space<vmem>>, vector<64x2048xbf16>
    %cst = arith.constant dense<0.000000e+00> : vector<8x2048xf32>
    %2 = tpu.matmul %0, %1, %cst {dimension_numbers = #tpu.dot_dimension_numbers<[1], [0], [0], [1], [0, 0, 1, 1], [], []>} : vector<8x64xbf16>, vector<64x2048xbf16>, vector<8x2048xf32> -> vector<8x2048xf32>
    %c0_3 = arith.constant 0 : index
    %c0_4 = arith.constant 0 : index
    %3 = vector.load %arg3[%c0_3, %c0_4] : memref<8x2048xf32, #tpu.memory_space<vmem>>, vector<8x2048xf32>
    tpu.vector_store %arg3[%c0_3, %c0_4], %2 {strides = array<i32>} : memref<8x2048xf32, #tpu.memory_space<vmem>>, vector<8x2048xf32>,
    return
  }
  func.func @transform_0(%arg0: i32) -> (i32, i32) {
    %c0_i32 = arith.constant 0 : i32
    %c0_i32_0 = arith.constant 0 : i32
    return %c0_i32, %arg0 : i32, i32
  }
  func.func @transform_1(%arg0: i32) -> (i32, i32) {
    %c0_i32 = arith.constant 0 : i32
    %c0_i32_0 = arith.constant 0 : i32
    %c0_i32_1 = arith.constant 0 : i32
    return %c0_i32, %c0_i32_0 : i32, i32
  }
  func.func @transform_2(%arg0: i32) -> (i32, i32) {
    %c0_i32 = arith.constant 0 : i32
    %c0_i32_0 = arith.constant 0 : i32
    return %c0_i32, %arg0 : i32, i32
  }
}

module attributes {stable_mosaic.version = 11 : i64} {
  func.func @_gemm_kernel(%arg0: i32, %arg1: memref<128x512xbf16, #tpu.memory_space<vmem>>, %arg2: memref<16x128xbf16, #tpu.memory_space<vmem>>, %arg3: memref<16x512xf32, #tpu.memory_space<vmem>>) attributes {dimension_semantics = [#tpu.dimension_semantics<parallel>], iteration_bounds = array<i64: 1>, scalar_prefetch = 0 : i64, scratch_operands = 0 : i64, tpu.core_type = #tpu.core_type<tc>, window_params = [{transform_indices = @transform_0, window_bounds = array<i64: 128, 512>}, {pipeline_mode = #tpu.pipeline_mode<synchronous>, transform_indices = @transform_1, window_bounds = array<i64: 16, 128>}, {transform_indices = @transform_2, window_bounds = array<i64: 16, 512>}]} {
    %c0 = arith.constant 0 : index
    %c0_0 = arith.constant 0 : index
    %0 = vector.load %arg2[%c0, %c0_0] : memref<16x128xbf16, #tpu.memory_space<vmem>>, vector<16x128xbf16>
    %c0_1 = arith.constant 0 : index
    %c0_2 = arith.constant 0 : index
    %1 = vector.load %arg1[%c0_1, %c0_2] : memref<128x512xbf16, #tpu.memory_space<vmem>>, vector<128x512xbf16>
    %cst = arith.constant dense<0.000000e+00> : vector<16x512xf32>
    %2 = tpu.matmul %0, %1, %cst {dimension_numbers = #tpu.dot_dimension_numbers<[1], [0], [0], [1], [0, 0, 1, 1], [], []>} : vector<16x128xbf16>, vector<128x512xbf16>, vector<16x512xf32> -> vector<16x512xf32>
    %c0_3 = arith.constant 0 : index
    %c0_4 = arith.constant 0 : index
    %3 = vector.load %arg3[%c0_3, %c0_4] : memref<16x512xf32, #tpu.memory_space<vmem>>, vector<16x512xf32>
    tpu.vector_store %arg3[%c0_3, %c0_4], %2 {strides = array<i32>} : memref<16x512xf32, #tpu.memory_space<vmem>>, vector<16x512xf32>,
    return
  }
  func.func @transform_0(%arg0: i32) -> (i32, i32) {
    %c0_i32 = arith.constant 0 : i32
    %c0_i32_0 = arith.constant 0 : i32
    return %c0_i32, %arg0 : i32, i32
  }
  func.func @transform_1(%arg0: i32) -> (i32, i32) {
    %c0_i32 = arith.constant 0 : i32
    %c0_i32_0 = arith.constant 0 : i32
    %c0_i32_1 = arith.constant 0 : i32
    return %c0_i32, %c0_i32_0 : i32, i32
  }
  func.func @transform_2(%arg0: i32) -> (i32, i32) {
    %c0_i32 = arith.constant 0 : i32
    %c0_i32_0 = arith.constant 0 : i32
    return %c0_i32, %arg0 : i32, i32
  }
}

module attributes {stable_mosaic.version = 11 : i64} {
  func.func @_gemm_kernel(%arg0: i32, %arg1: memref<256x128xbf16, #tpu.memory_space<vmem>>, %arg2: memref<32x256xbf16, #tpu.memory_space<vmem>>, %arg3: memref<32x128xf32, #tpu.memory_space<vmem>>) attributes {dimension_semantics = [#tpu.dimension_semantics<parallel>], iteration_bounds = array<i64: 1>, scalar_prefetch = 0 : i64, scratch_operands = 0 : i64, tpu.core_type = #tpu.core_type<tc>, window_params = [{transform_indices = @transform_0, window_bounds = array<i64: 256, 128>}, {pipeline_mode = #tpu.pipeline_mode<synchronous>, transform_indices = @transform_1, window_bounds = array<i64: 32, 256>}, {transform_indices = @transform_2, window_bounds = array<i64: 32, 128>}]} {
    %c0 = arith.constant 0 : index
    %c0_0 = arith.constant 0 : index
    %0 = vector.load %arg2[%c0, %c0_0] : memref<32x256xbf16, #tpu.memory_space<vmem>>, vector<32x256xbf16>
    %c0_1 = arith.constant 0 : index
    %c0_2 = arith.constant 0 : index
    %1 = vector.load %arg1[%c0_1, %c0_2] : memref<256x128xbf16, #tpu.memory_space<vmem>>, vector<256x128xbf16>
    %cst = arith.constant dense<0.000000e+00> : vector<32x128xf32>
    %2 = tpu.matmul %0, %1, %cst {dimension_numbers = #tpu.dot_dimension_numbers<[1], [0], [0], [1], [0, 0, 1, 1], [], []>} : vector<32x256xbf16>, vector<256x128xbf16>, vector<32x128xf32> -> vector<32x128xf32>
    %c0_3 = arith.constant 0 : index
    %c0_4 = arith.constant 0 : index
    %3 = vector.load %arg3[%c0_3, %c0_4] : memref<32x128xf32, #tpu.memory_space<vmem>>, vector<32x128xf32>
    tpu.vector_store %arg3[%c0_3, %c0_4], %2 {strides = array<i32>} : memref<32x128xf32, #tpu.memory_space<vmem>>, vector<32x128xf32>,
    return
  }
  func.func @transform_0(%arg0: i32) -> (i32, i32) {
    %c0_i32 = arith.constant 0 : i32
    %c0_i32_0 = arith.constant 0 : i32
    return %c0_i32, %arg0 : i32, i32
  }
  func.func @transform_1(%arg0: i32) -> (i32, i32) {
    %c0_i32 = arith.constant 0 : i32
    %c0_i32_0 = arith.constant 0 : i32
    %c0_i32_1 = arith.constant 0 : i32
    return %c0_i32, %c0_i32_0 : i32, i32
  }
  func.func @transform_2(%arg0: i32) -> (i32, i32) {
    %c0_i32 = arith.constant 0 : i32
    %c0_i32_0 = arith.constant 0 : i32
    return %c0_i32, %arg0 : i32, i32
  }
}

module attributes {stable_mosaic.version = 11 : i64} {
  func.func @_gemm_kernel(%arg0: i32, %arg1: memref<512x128xbf16, #tpu.memory_space<vmem>>, %arg2: memref<64x512xbf16, #tpu.memory_space<vmem>>, %arg3: memref<64x128xf32, #tpu.memory_space<vmem>>) attributes {dimension_semantics = [#tpu.dimension_semantics<parallel>], iteration_bounds = array<i64: 1>, scalar_prefetch = 0 : i64, scratch_operands = 0 : i64, tpu.core_type = #tpu.core_type<tc>, window_params = [{transform_indices = @transform_0, window_bounds = array<i64: 512, 128>}, {pipeline_mode = #tpu.pipeline_mode<synchronous>, transform_indices = @transform_1, window_bounds = array<i64: 64, 512>}, {transform_indices = @transform_2, window_bounds = array<i64: 64, 128>}]} {
    %c0 = arith.constant 0 : index
    %c0_0 = arith.constant 0 : index
    %0 = vector.load %arg2[%c0, %c0_0] : memref<64x512xbf16, #tpu.memory_space<vmem>>, vector<64x512xbf16>
    %c0_1 = arith.constant 0 : index
    %c0_2 = arith.constant 0 : index
    %1 = vector.load %arg1[%c0_1, %c0_2] : memref<512x128xbf16, #tpu.memory_space<vmem>>, vector<512x128xbf16>
    %cst = arith.constant dense<0.000000e+00> : vector<64x128xf32>
    %2 = tpu.matmul %0, %1, %cst {dimension_numbers = #tpu.dot_dimension_numbers<[1], [0], [0], [1], [0, 0, 1, 1], [], []>} : vector<64x512xbf16>, vector<512x128xbf16>, vector<64x128xf32> -> vector<64x128xf32>
    %c0_3 = arith.constant 0 : index
    %c0_4 = arith.constant 0 : index
    %3 = vector.load %arg3[%c0_3, %c0_4] : memref<64x128xf32, #tpu.memory_space<vmem>>, vector<64x128xf32>
    tpu.vector_store %arg3[%c0_3, %c0_4], %2 {strides = array<i32>} : memref<64x128xf32, #tpu.memory_space<vmem>>, vector<64x128xf32>,
    return
  }
  func.func @transform_0(%arg0: i32) -> (i32, i32) {
    %c0_i32 = arith.constant 0 : i32
    %c0_i32_0 = arith.constant 0 : i32
    return %c0_i32, %arg0 : i32, i32
  }
  func.func @transform_1(%arg0: i32) -> (i32, i32) {
    %c0_i32 = arith.constant 0 : i32
    %c0_i32_0 = arith.constant 0 : i32
    %c0_i32_1 = arith.constant 0 : i32
    return %c0_i32, %c0_i32_0 : i32, i32
  }
  func.func @transform_2(%arg0: i32) -> (i32, i32) {
    %c0_i32 = arith.constant 0 : i32
    %c0_i32_0 = arith.constant 0 : i32
    return %c0_i32, %arg0 : i32, i32
  }
}

module attributes {stable_mosaic.version = 11 : i64} {
  func.func @_gemm_kernel(%arg0: i32, %arg1: memref<1024x128xbf16, #tpu.memory_space<vmem>>, %arg2: memref<64x1024xbf16, #tpu.memory_space<vmem>>, %arg3: memref<64x128xf32, #tpu.memory_space<vmem>>) attributes {dimension_semantics = [#tpu.dimension_semantics<parallel>], iteration_bounds = array<i64: 1>, scalar_prefetch = 0 : i64, scratch_operands = 0 : i64, tpu.core_type = #tpu.core_type<tc>, window_params = [{transform_indices = @transform_0, window_bounds = array<i64: 1024, 128>}, {pipeline_mode = #tpu.pipeline_mode<synchronous>, transform_indices = @transform_1, window_bounds = array<i64: 64, 1024>}, {transform_indices = @transform_2, window_bounds = array<i64: 64, 128>}]} {
    %c0 = arith.constant 0 : index
    %c0_0 = arith.constant 0 : index
    %0 = vector.load %arg2[%c0, %c0_0] : memref<64x1024xbf16, #tpu.memory_space<vmem>>, vector<64x1024xbf16>
    %c0_1 = arith.constant 0 : index
    %c0_2 = arith.constant 0 : index
    %1 = vector.load %arg1[%c0_1, %c0_2] : memref<1024x128xbf16, #tpu.memory_space<vmem>>, vector<1024x128xbf16>
    %cst = arith.constant dense<0.000000e+00> : vector<64x128xf32>
    %2 = tpu.matmul %0, %1, %cst {dimension_numbers = #tpu.dot_dimension_numbers<[1], [0], [0], [1], [0, 0, 1, 1], [], []>} : vector<64x1024xbf16>, vector<1024x128xbf16>, vector<64x128xf32> -> vector<64x128xf32>
    %c0_3 = arith.constant 0 : index
    %c0_4 = arith.constant 0 : index
    %3 = vector.load %arg3[%c0_3, %c0_4] : memref<64x128xf32, #tpu.memory_space<vmem>>, vector<64x128xf32>
    tpu.vector_store %arg3[%c0_3, %c0_4], %2 {strides = array<i32>} : memref<64x128xf32, #tpu.memory_space<vmem>>, vector<64x128xf32>,
    return
  }
  func.func @transform_0(%arg0: i32) -> (i32, i32) {
    %c0_i32 = arith.constant 0 : i32
    %c0_i32_0 = arith.constant 0 : i32
    return %c0_i32, %arg0 : i32, i32
  }
  func.func @transform_1(%arg0: i32) -> (i32, i32) {
    %c0_i32 = arith.constant 0 : i32
    %c0_i32_0 = arith.constant 0 : i32
    %c0_i32_1 = arith.constant 0 : i32
    return %c0_i32, %c0_i32_0 : i32, i32
  }
  func.func @transform_2(%arg0: i32) -> (i32, i32) {
    %c0_i32 = arith.constant 0 : i32
    %c0_i32_0 = arith.constant 0 : i32
    return %c0_i32, %arg0 : i32, i32
  }
}

</mosaic_0001>

<llo_original>
// kernel: encoder_forward.6
$region0: #{encoder_forward.6}
  #allocation0 [shape = 'u32[]', space=smem, size = 0x4, offset = 0x4, fixed_abs, tag = 'smem constant byte address 0x4 - core index']
  #allocation1 [shape = 'u32[144,128]{1,0:T(1,128)}', space=vmem, size = 0x12000, scoped, tag = 'internal scratch']
  %s0 = inlined_call_operand.vmem [shape: bf16[64,2048], index: 0, kind: input, shape index: {}]
  %s1 = inlined_call_operand.vmem [shape: bf16[8,64], index: 1, kind: input, shape index: {}]
  %s2 = inlined_call_operand.vmem [shape: f32[8,2048], index: 2, kind: output, shape index: {}]
  %s3 = sld [smem:[#allocation0]]
  $region18: #{encoder_forward.6} parent=0
    _
  %s5 = ssub.s32 1, %s3
  %s6 = scalar_select 0, %s5, %s3
  // Predicated region
  $region2: #{encoder_forward.6} parent=0 // pred_check
    _
  $region3: #{encoder_forward.6} parent=0 // pred_check_branch
    %8 = sbr.rel (0) target = $region5
  $region4: #{encoder_forward.6} parent=0 // pred_region
    _
  $region5: #{encoder_forward.6} parent=0 // pred_fallthru
    _
  // Predicated region
  $region6: #{encoder_forward.6} parent=0 // pred_check
    _
  $region7: #{encoder_forward.6} parent=0 // pred_check_branch
    %10 = sbr.rel (0) target = $region9
  $region8: #{encoder_forward.6} parent=0 // pred_region
    _
  $region9: #{encoder_forward.6} parent=0 // pred_fallthru
    _
  %v12 = vld [vmem:[%s1] sm:$0xf]
  %v13 = vld [vmem:[%s0] sm:$0xff]
  %v14 = vld [vmem:[%s0 + $0x8] sm:$0xff]
  %v15 = vld [vmem:[%s0 + $0x10] sm:$0xff]
  %v16 = vld [vmem:[%s0 + $0x18] sm:$0xff]
  %v17 = vld [vmem:[%s0 + $0x20] sm:$0xff]
  %v18 = vld [vmem:[%s0 + $0x28] sm:$0xff]
  %v19 = vld [vmem:[%s0 + $0x30] sm:$0xff]
  %v20 = vld [vmem:[%s0 + $0x38] sm:$0xff]
  %v21 = vld [vmem:[%s0 + $0x40] sm:$0xff]
  %v22 = vld [vmem:[%s0 + $0x48] sm:$0xff]
  %v23 = vld [vmem:[%s0 + $0x50] sm:$0xff]
  %v24 = vld [vmem:[%s0 + $0x58] sm:$0xff]
  %v25 = vld [vmem:[%s0 + $0x60] sm:$0xff]
  %v26 = vld [vmem:[%s0 + $0x68] sm:$0xff]
  %v27 = vld [vmem:[%s0 + $0x70] sm:$0xff]
  %v28 = vld [vmem:[%s0 + $0x78] sm:$0xff]
  %v29 = vld [vmem:[%s0 + $0x80] sm:$0xff]
  %v30 = vld [vmem:[%s0 + $0x88] sm:$0xff]
  %v31 = vld [vmem:[%s0 + $0x90] sm:$0xff]
  %v32 = vld [vmem:[%s0 + $0x98] sm:$0xff]
  %v33 = vld [vmem:[%s0 + $0xa0] sm:$0xff]
  %v34 = vld [vmem:[%s0 + $0xa8] sm:$0xff]
  %v35 = vld [vmem:[%s0 + $0xb0] sm:$0xff]
  %v36 = vld [vmem:[%s0 + $0xb8] sm:$0xff]
  %v37 = vld [vmem:[%s0 + $0xc0] sm:$0xff]
  %v38 = vld [vmem:[%s0 + $0xc8] sm:$0xff]
  %v39 = vld [vmem:[%s0 + $0xd0] sm:$0xff]
  %v40 = vld [vmem:[%s0 + $0xd8] sm:$0xff]
  %v41 = vld [vmem:[%s0 + $0xe0] sm:$0xff]
  %v42 = vld [vmem:[%s0 + $0xe8] sm:$0xff]
  %v43 = vld [vmem:[%s0 + $0xf0] sm:$0xff]
  %v44 = vld [vmem:[%s0 + $0xf8] sm:$0xff]
  %v45 = vld [vmem:[%s0 + $0x100] sm:$0xff]
  %v46 = vld [vmem:[%s0 + $0x108] sm:$0xff]
  %v47 = vld [vmem:[%s0 + $0x110] sm:$0xff]
  %v48 = vld [vmem:[%s0 + $0x118] sm:$0xff]
  %v49 = vld [vmem:[%s0 + $0x120] sm:$0xff]
  %v50 = vld [vmem:[%s0 + $0x128] sm:$0xff]
  %v51 = vld [vmem:[%s0 + $0x130] sm:$0xff]
  %v52 = vld [vmem:[%s0 + $0x138] sm:$0xff]
  %v53 = vld [vmem:[%s0 + $0x140] sm:$0xff]
  %v54 = vld [vmem:[%s0 + $0x148] sm:$0xff]
  %v55 = vld [vmem:[%s0 + $0x150] sm:$0xff]
  %v56 = vld [vmem:[%s0 + $0x158] sm:$0xff]
  %v57 = vld [vmem:[%s0 + $0x160] sm:$0xff]
  %v58 = vld [vmem:[%s0 + $0x168] sm:$0xff]
  %v59 = vld [vmem:[%s0 + $0x170] sm:$0xff]
  %v60 = vld [vmem:[%s0 + $0x178] sm:$0xff]
  %v61 = vld [vmem:[%s0 + $0x180] sm:$0xff]
  %v62 = vld [vmem:[%s0 + $0x188] sm:$0xff]
  %v63 = vld [vmem:[%s0 + $0x190] sm:$0xff]
  %v64 = vld [vmem:[%s0 + $0x198] sm:$0xff]
  %v65 = vld [vmem:[%s0 + $0x1a0] sm:$0xff]
  %v66 = vld [vmem:[%s0 + $0x1a8] sm:$0xff]
  %v67 = vld [vmem:[%s0 + $0x1b0] sm:$0xff]
  %v68 = vld [vmem:[%s0 + $0x1b8] sm:$0xff]
  %v69 = vld [vmem:[%s0 + $0x1c0] sm:$0xff]
  %v70 = vld [vmem:[%s0 + $0x1c8] sm:$0xff]
  %v71 = vld [vmem:[%s0 + $0x1d0] sm:$0xff]
  %v72 = vld [vmem:[%s0 + $0x1d8] sm:$0xff]
  %v73 = vld [vmem:[%s0 + $0x1e0] sm:$0xff]
  %v74 = vld [vmem:[%s0 + $0x1e8] sm:$0xff]
  %v75 = vld [vmem:[%s0 + $0x1f0] sm:$0xff]
  %v76 = vld [vmem:[%s0 + $0x1f8] sm:$0xff]
  %v141 = vunpack.c.l.b16 %v13
  %v142 = vunpack.c.h.b16 %v13
  %v143 = vunpack.c.l.b16 %v14
  %v144 = vunpack.c.h.b16 %v14
  %v145 = vunpack.c.l.b16 %v15
  %v146 = vunpack.c.h.b16 %v15
  %v147 = vunpack.c.l.b16 %v16
  %v148 = vunpack.c.h.b16 %v16
  %v149 = vunpack.c.l.b16 %v17
  %v150 = vunpack.c.h.b16 %v17
  %v151 = vunpack.c.l.b16 %v18
  %v152 = vunpack.c.h.b16 %v18
  %v153 = vunpack.c.l.b16 %v19
  %v154 = vunpack.c.h.b16 %v19
  %v155 = vunpack.c.l.b16 %v20
  %v156 = vunpack.c.h.b16 %v20
  %v157 = vunpack.c.l.b16 %v21
  %v158 = vunpack.c.h.b16 %v21
  %v159 = vunpack.c.l.b16 %v22
  %v160 = vunpack.c.h.b16 %v22
  %v161 = vunpack.c.l.b16 %v23
  %v162 = vunpack.c.h.b16 %v23
  %v163 = vunpack.c.l.b16 %v24
  %v164 = vunpack.c.h.b16 %v24
  %v165 = vunpack.c.l.b16 %v25
  %v166 = vunpack.c.h.b16 %v25
  %v167 = vunpack.c.l.b16 %v26
  %v168 = vunpack.c.h.b16 %v26
  %v169 = vunpack.c.l.b16 %v27
  %v170 = vunpack.c.h.b16 %v27
  %v171 = vunpack.c.l.b16 %v28
  %v172 = vunpack.c.h.b16 %v28
  %v173 = vunpack.c.l.b16 %v29
  %v174 = vunpack.c.h.b16 %v29
  %v175 = vunpack.c.l.b16 %v30
  %v176 = vunpack.c.h.b16 %v30
  %v177 = vunpack.c.l.b16 %v31
  %v178 = vunpack.c.h.b16 %v31
  %v179 = vunpack.c.l.b16 %v32
  %v180 = vunpack.c.h.b16 %v32
  %v181 = vunpack.c.l.b16 %v33
  %v182 = vunpack.c.h.b16 %v33
  %v183 = vunpack.c.l.b16 %v34
  %v184 = vunpack.c.h.b16 %v34
  %v185 = vunpack.c.l.b16 %v35
  %v186 = vunpack.c.h.b16 %v35
  %v187 = vunpack.c.l.b16 %v36
  %v188 = vunpack.c.h.b16 %v36
  %v189 = vunpack.c.l.b16 %v37
  %v190 = vunpack.c.h.b16 %v37
  %v191 = vunpack.c.l.b16 %v38
  %v192 = vunpack.c.h.b16 %v38
  %v193 = vunpack.c.l.b16 %v39
  %v194 = vunpack.c.h.b16 %v39
  %v195 = vunpack.c.l.b16 %v40
  %v196 = vunpack.c.h.b16 %v40
  %v197 = vunpack.c.l.b16 %v41
  %v198 = vunpack.c.h.b16 %v41
  %v199 = vunpack.c.l.b16 %v42
  %v200 = vunpack.c.h.b16 %v42
  %v201 = vunpack.c.l.b16 %v43
  %v202 = vunpack.c.h.b16 %v43
  %v203 = vunpack.c.l.b16 %v44
  %v204 = vunpack.c.h.b16 %v44
  %v205 = vunpack.c.l.b16 %v45
  %v206 = vunpack.c.h.b16 %v45
  %v207 = vunpack.c.l.b16 %v46
  %v208 = vunpack.c.h.b16 %v46
  %v209 = vunpack.c.l.b16 %v47
  %v210 = vunpack.c.h.b16 %v47
  %v211 = vunpack.c.l.b16 %v48
  %v212 = vunpack.c.h.b16 %v48
  %v213 = vunpack.c.l.b16 %v49
  %v214 = vunpack.c.h.b16 %v49
  %v215 = vunpack.c.l.b16 %v50
  %v216 = vunpack.c.h.b16 %v50
  %v217 = vunpack.c.l.b16 %v51
  %v218 = vunpack.c.h.b16 %v51
  %v219 = vunpack.c.l.b16 %v52
  %v220 = vunpack.c.h.b16 %v52
  %v221 = vunpack.c.l.b16 %v53
  %v222 = vunpack.c.h.b16 %v53
  %v223 = vunpack.c.l.b16 %v54
  %v224 = vunpack.c.h.b16 %v54
  %v225 = vunpack.c.l.b16 %v55
  %v226 = vunpack.c.h.b16 %v55
  %v227 = vunpack.c.l.b16 %v56
  %v228 = vunpack.c.h.b16 %v56
  %v229 = vunpack.c.l.b16 %v57
  %v230 = vunpack.c.h.b16 %v57
  %v231 = vunpack.c.l.b16 %v58
  %v232 = vunpack.c.h.b16 %v58
  %v233 = vunpack.c.l.b16 %v59
  %v234 = vunpack.c.h.b16 %v59
  %v235 = vunpack.c.l.b16 %v60
  %v236 = vunpack.c.h.b16 %v60
  %v237 = vunpack.c.l.b16 %v61
  %v238 = vunpack.c.h.b16 %v61
  %v239 = vunpack.c.l.b16 %v62
  %v240 = vunpack.c.h.b16 %v62
  %v241 = vunpack.c.l.b16 %v63
  %v242 = vunpack.c.h.b16 %v63
  %v243 = vunpack.c.l.b16 %v64
  %v244 = vunpack.c.h.b16 %v64
  %v245 = vunpack.c.l.b16 %v65
  %v246 = vunpack.c.h.b16 %v65
  %v247 = vunpack.c.l.b16 %v66
  %v248 = vunpack.c.h.b16 %v66
  %v249 = vunpack.c.l.b16 %v67
  %v250 = vunpack.c.h.b16 %v67
  %v251 = vunpack.c.l.b16 %v68
  %v252 = vunpack.c.h.b16 %v68
  %v253 = vunpack.c.l.b16 %v69
  %v254 = vunpack.c.h.b16 %v69
  %v255 = vunpack.c.l.b16 %v70
  %v256 = vunpack.c.h.b16 %v70
  %v257 = vunpack.c.l.b16 %v71
  %v258 = vunpack.c.h.b16 %v71
  %v259 = vunpack.c.l.b16 %v72
  %v260 = vunpack.c.h.b16 %v72
  %v261 = vunpack.c.l.b16 %v73
  %v262 = vunpack.c.h.b16 %v73
  %v263 = vunpack.c.l.b16 %v74
  %v264 = vunpack.c.h.b16 %v74
  %v265 = vunpack.c.l.b16 %v75
  %v266 = vunpack.c.h.b16 %v75
  %v267 = vunpack.c.l.b16 %v76
  %v268 = vunpack.c.h.b16 %v76
  %v269 = vpack.c.b16 %v157, %v141
  %v270 = vpack.c.b16 %v158, %v142
  %v271 = vpack.c.b16 %v159, %v143
  %v272 = vpack.c.b16 %v160, %v144
  %v273 = vpack.c.b16 %v161, %v145
  %v274 = vpack.c.b16 %v162, %v146
  %v275 = vpack.c.b16 %v163, %v147
  %v276 = vpack.c.b16 %v164, %v148
  %v277 = vpack.c.b16 %v165, %v149
  %v278 = vpack.c.b16 %v166, %v150
  %v279 = vpack.c.b16 %v167, %v151
  %v280 = vpack.c.b16 %v168, %v152
  %v281 = vpack.c.b16 %v169, %v153
  %v282 = vpack.c.b16 %v170, %v154
  %v283 = vpack.c.b16 %v171, %v155
  %v284 = vpack.c.b16 %v172, %v156
  %v285 = vpack.c.b16 %v189, %v173
  %v286 = vpack.c.b16 %v190, %v174
  %v287 = vpack.c.b16 %v191, %v175
  %v288 = vpack.c.b16 %v192, %v176
  %v289 = vpack.c.b16 %v193, %v177
  %v290 = vpack.c.b16 %v194, %v178
  %v291 = vpack.c.b16 %v195, %v179
  %v292 = vpack.c.b16 %v196, %v180
  %v293 = vpack.c.b16 %v197, %v181
  %v294 = vpack.c.b16 %v198, %v182
  %v295 = vpack.c.b16 %v199, %v183
  %v296 = vpack.c.b16 %v200, %v184
  %v297 = vpack.c.b16 %v201, %v185
  %v298 = vpack.c.b16 %v202, %v186
  %v299 = vpack.c.b16 %v203, %v187
  %v300 = vpack.c.b16 %v204, %v188
  %v301 = vpack.c.b16 %v221, %v205
  %v302 = vpack.c.b16 %v222, %v206
  %v303 = vpack.c.b16 %v223, %v207
  %v304 = vpack.c.b16 %v224, %v208
  %v305 = vpack.c.b16 %v225, %v209
  %v306 = vpack.c.b16 %v226, %v210
  %v307 = vpack.c.b16 %v227, %v211
  %v308 = vpack.c.b16 %v228, %v212
  %v309 = vpack.c.b16 %v229, %v213
  %v310 = vpack.c.b16 %v230, %v214
  %v311 = vpack.c.b16 %v231, %v215
  %v312 = vpack.c.b16 %v232, %v216
  %v313 = vpack.c.b16 %v233, %v217
  %v314 = vpack.c.b16 %v234, %v218
  %v315 = vpack.c.b16 %v235, %v219
  %v316 = vpack.c.b16 %v236, %v220
  %v317 = vpack.c.b16 %v253, %v237
  %v318 = vpack.c.b16 %v254, %v238
  %v319 = vpack.c.b16 %v255, %v239
  %v320 = vpack.c.b16 %v256, %v240
  %v321 = vpack.c.b16 %v257, %v241
  %v322 = vpack.c.b16 %v258, %v242
  %v323 = vpack.c.b16 %v259, %v243
  %v324 = vpack.c.b16 %v260, %v244
  %v325 = vpack.c.b16 %v261, %v245
  %v326 = vpack.c.b16 %v262, %v246
  %v327 = vpack.c.b16 %v263, %v247
  %v328 = vpack.c.b16 %v264, %v248
  %v329 = vpack.c.b16 %v265, %v249
  %v330 = vpack.c.b16 %v266, %v250
  %v331 = vpack.c.b16 %v267, %v251
  %v332 = vpack.c.b16 %v268, %v252
  %vm397 = vcmask 523264
  %v399 = vsel %vm397, %v12, 0
  %401 = vmatprep.subr.bf16.mxu0 0
  %402 = vmatpush1.bf16.msra.mxu0 0
  %403 = vmatprep.subr.bf16.mxu0 0
  %404 = vmatpush1.bf16.msra.mxu0 0
  %405 = vmatprep.subr.bf16.mxu0 0
  %406 = vmatpush1.bf16.msra.mxu0 0
  %407 = vmatprep.subr.bf16.mxu0 0
  %408 = vmatpush1.bf16.msra.mxu0 0
  %409 = vmatprep.subr.bf16.mxu0 %v318
  %410 = vmatpush1.bf16.msra.mxu0 %v317
  %411 = vmatprep.subr.bf16.mxu0 %v302
  %412 = vmatpush1.bf16.msra.mxu0 %v301
  %413 = vmatprep.subr.bf16.mxu0 %v286
  %414 = vmatpush1.bf16.msra.mxu0 %v285
  %415 = vmatprep.subr.bf16.mxu0 %v270
  %416 = vmatpush1.bf16.msra.mxu0 %v269
  %417 = vmatprep.subr.bf16.mxu0 0
  %418 = vmatpush2.bf16.msra.mxu0 0
  %419 = vmatprep.subr.bf16.mxu0 0
  %420 = vmatpush2.bf16.msra.mxu0 0
  %421 = vmatprep.subr.bf16.mxu0 0
  %422 = vmatpush2.bf16.msra.mxu0 0
  %423 = vmatprep.subr.bf16.mxu0 0
  %424 = vmatpush2.bf16.msra.mxu0 0
  %425 = vmatprep.subr.bf16.mxu0 0
  %426 = vmatpush2.bf16.msra.mxu0 0
  %427 = vmatprep.subr.bf16.mxu0 0
  %428 = vmatpush2.bf16.msra.mxu0 0
  %429 = vmatprep.subr.bf16.mxu0 0
  %430 = vmatpush2.bf16.msra.mxu0 0
  %431 = vmatprep.subr.bf16.mxu0 0
  %432 = vmatpush2.bf16.msra.mxu0 0
  %433 = vmatprep.mubr.bf16.mxu0 0
  %434 = vmatmul.mubr.bf16.gmra.mxu0 %v399
  %v435 = vpop.f32.mrf.mxu0
  %v436 = vadd.f32 0.0, %v435
  %v437 = vpop.f32.mrf.mxu0
  %v438 = vadd.f32 0.0, %v437
  %v439 = vpop.f32.mrf.mxu0
  %v440 = vpop.f32.mrf.mxu0
  %441 = vdwg.mxu0
  %442 = vmatprep.subr.bf16.mxu0 0
  %443 = vmatpush1.bf16.msra.mxu0 0
  %444 = vmatprep.subr.bf16.mxu0 0
  %445 = vmatpush1.bf16.msra.mxu0 0
  %446 = vmatprep.subr.bf16.mxu0 0
  %447 = vmatpush1.bf16.msra.mxu0 0
  %448 = vmatprep.subr.bf16.mxu0 0
  %449 = vmatpush1.bf16.msra.mxu0 0
  %450 = vmatprep.subr.bf16.mxu0 %v320
  %451 = vmatpush1.bf16.msra.mxu0 %v319
  %452 = vmatprep.subr.bf16.mxu0 %v304
  %453 = vmatpush1.bf16.msra.mxu0 %v303
  %454 = vmatprep.subr.bf16.mxu0 %v288
  %455 = vmatpush1.bf16.msra.mxu0 %v287
  %456 = vmatprep.subr.bf16.mxu0 %v272
  %457 = vmatpush1.bf16.msra.mxu0 %v271
  %458 = vmatprep.subr.bf16.mxu0 0
  %459 = vmatpush2.bf16.msra.mxu0 0
  %460 = vmatprep.subr.bf16.mxu0 0
  %461 = vmatpush2.bf16.msra.mxu0 0
  %462 = vmatprep.subr.bf16.mxu0 0
  %463 = vmatpush2.bf16.msra.mxu0 0
  %464 = vmatprep.subr.bf16.mxu0 0
  %465 = vmatpush2.bf16.msra.mxu0 0
  %466 = vmatprep.subr.bf16.mxu0 0
  %467 = vmatpush2.bf16.msra.mxu0 0
  %468 = vmatprep.subr.bf16.mxu0 0
  %469 = vmatpush2.bf16.msra.mxu0 0
  %470 = vmatprep.subr.bf16.mxu0 0
  %471 = vmatpush2.bf16.msra.mxu0 0
  %472 = vmatprep.subr.bf16.mxu0 0
  %473 = vmatpush2.bf16.msra.mxu0 0
  %474 = vmatprep.mubr.bf16.mxu0 0
  %475 = vmatmul.mubr.bf16.gmra.mxu0 %v399
  %v476 = vpop.f32.mrf.mxu0
  %v477 = vadd.f32 0.0, %v476
  %v478 = vpop.f32.mrf.mxu0
  %v479 = vadd.f32 0.0, %v478
  %v480 = vpop.f32.mrf.mxu0
  %v481 = vpop.f32.mrf.mxu0
  %482 = vdwg.mxu0
  %483 = vmatprep.subr.bf16.mxu0 0
  %484 = vmatpush1.bf16.msra.mxu0 0
  %485 = vmatprep.subr.bf16.mxu0 0
  %486 = vmatpush1.bf16.msra.mxu0 0
  %487 = vmatprep.subr.bf16.mxu0 0
  %488 = vmatpush1.bf16.msra.mxu0 0
  %489 = vmatprep.subr.bf16.mxu0 0
  %490 = vmatpush1.bf16.msra.mxu0 0
  %491 = vmatprep.subr.bf16.mxu0 %v322
  %492 = vmatpush1.bf16.msra.mxu0 %v321
  %493 = vmatprep.subr.bf16.mxu0 %v306
  %494 = vmatpush1.bf16.msra.mxu0 %v305
  %495 = vmatprep.subr.bf16.mxu0 %v290
  %496 = vmatpush1.bf16.msra.mxu0 %v289
  %497 = vmatprep.subr.bf16.mxu0 %v274
  %498 = vmatpush1.bf16.msra.mxu0 %v273
  %499 = vmatprep.subr.bf16.mxu0 0
  %500 = vmatpush2.bf16.msra.mxu0 0
  %501 = vmatprep.subr.bf16.mxu0 0
  %502 = vmatpush2.bf16.msra.mxu0 0
  %503 = vmatprep.subr.bf16.mxu0 0
  %504 = vmatpush2.bf16.msra.mxu0 0
  %505 = vmatprep.subr.bf16.mxu0 0
  %506 = vmatpush2.bf16.msra.mxu0 0
  %507 = vmatprep.subr.bf16.mxu0 0
  %508 = vmatpush2.bf16.msra.mxu0 0
  %509 = vmatprep.subr.bf16.mxu0 0
  %510 = vmatpush2.bf16.msra.mxu0 0
  %511 = vmatprep.subr.bf16.mxu0 0
  %512 = vmatpush2.bf16.msra.mxu0 0
  %513 = vmatprep.subr.bf16.mxu0 0
  %514 = vmatpush2.bf16.msra.mxu0 0
  %515 = vmatprep.mubr.bf16.mxu0 0
  %516 = vmatmul.mubr.bf16.gmra.mxu0 %v399
  %v517 = vpop.f32.mrf.mxu0
  %v518 = vadd.f32 0.0, %v517
  %v519 = vpop.f32.mrf.mxu0
  %v520 = vadd.f32 0.0, %v519
  %v521 = vpop.f32.mrf.mxu0
  %v522 = vpop.f32.mrf.mxu0
  %523 = vdwg.mxu0
  %524 = vmatprep.subr.bf16.mxu0 0
  %525 = vmatpush1.bf16.msra.mxu0 0
  %526 = vmatprep.subr.bf16.mxu0 0
  %527 = vmatpush1.bf16.msra.mxu0 0
  %528 = vmatprep.subr.bf16.mxu0 0
  %529 = vmatpush1.bf16.msra.mxu0 0
  %530 = vmatprep.subr.bf16.mxu0 0
  %531 = vmatpush1.bf16.msra.mxu0 0
  %532 = vmatprep.subr.bf16.mxu0 %v324
  %533 = vmatpush1.bf16.msra.mxu0 %v323
  %534 = vmatprep.subr.bf16.mxu0 %v308
  %535 = vmatpush1.bf16.msra.mxu0 %v307
  %536 = vmatprep.subr.bf16.mxu0 %v292
  %537 = vmatpush1.bf16.msra.mxu0 %v291
  %538 = vmatprep.subr.bf16.mxu0 %v276
  %539 = vmatpush1.bf16.msra.mxu0 %v275
  %540 = vmatprep.subr.bf16.mxu0 0
  %541 = vmatpush2.bf16.msra.mxu0 0
  %542 = vmatprep.subr.bf16.mxu0 0
  %543 = vmatpush2.bf16.msra.mxu0 0
  %544 = vmatprep.subr.bf16.mxu0 0
  %545 = vmatpush2.bf16.msra.mxu0 0
  %546 = vmatprep.subr.bf16.mxu0 0
  %547 = vmatpush2.bf16.msra.mxu0 0
  %548 = vmatprep.subr.bf16.mxu0 0
  %549 = vmatpush2.bf16.msra.mxu0 0
  %550 = vmatprep.subr.bf16.mxu0 0
  %551 = vmatpush2.bf16.msra.mxu0 0
  %552 = vmatprep.subr.bf16.mxu0 0
  %553 = vmatpush2.bf16.msra.mxu0 0
  %554 = vmatprep.subr.bf16.mxu0 0
  %555 = vmatpush2.bf16.msra.mxu0 0
  %556 = vmatprep.mubr.bf16.mxu0 0
  %557 = vmatmul.mubr.bf16.gmra.mxu0 %v399
  %v558 = vpop.f32.mrf.mxu0
  %v559 = vadd.f32 0.0, %v558
  %v560 = vpop.f32.mrf.mxu0
  %v561 = vadd.f32 0.0, %v560
  %v562 = vpop.f32.mrf.mxu0
  %v563 = vpop.f32.mrf.mxu0
  %564 = vdwg.mxu0
  %565 = vmatprep.subr.bf16.mxu0 0
  %566 = vmatpush1.bf16.msra.mxu0 0
  %567 = vmatprep.subr.bf16.mxu0 0
  %568 = vmatpush1.bf16.msra.mxu0 0
  %569 = vmatprep.subr.bf16.mxu0 0
  %570 = vmatpush1.bf16.msra.mxu0 0
  %571 = vmatprep.subr.bf16.mxu0 0
  %572 = vmatpush1.bf16.msra.mxu0 0
  %573 = vmatprep.subr.bf16.mxu0 %v326
  %574 = vmatpush1.bf16.msra.mxu0 %v325
  %575 = vmatprep.subr.bf16.mxu0 %v310
  %576 = vmatpush1.bf16.msra.mxu0 %v309
  %577 = vmatprep.subr.bf16.mxu0 %v294
  %578 = vmatpush1.bf16.msra.mxu0 %v293
  %579 = vmatprep.subr.bf16.mxu0 %v278
  %580 = vmatpush1.bf16.msra.mxu0 %v277
  %581 = vmatprep.subr.bf16.mxu0 0
  %582 = vmatpush2.bf16.msra.mxu0 0
  %583 = vmatprep.subr.bf16.mxu0 0
  %584 = vmatpush2.bf16.msra.mxu0 0
  %585 = vmatprep.subr.bf16.mxu0 0
  %586 = vmatpush2.bf16.msra.mxu0 0
  %587 = vmatprep.subr.bf16.mxu0 0
  %588 = vmatpush2.bf16.msra.mxu0 0
  %589 = vmatprep.subr.bf16.mxu0 0
  %590 = vmatpush2.bf16.msra.mxu0 0
  %591 = vmatprep.subr.bf16.mxu0 0
  %592 = vmatpush2.bf16.msra.mxu0 0
  %593 = vmatprep.subr.bf16.mxu0 0
  %594 = vmatpush2.bf16.msra.mxu0 0
  %595 = vmatprep.subr.bf16.mxu0 0
  %596 = vmatpush2.bf16.msra.mxu0 0
  %597 = vmatprep.mubr.bf16.mxu0 0
  %598 = vmatmul.mubr.bf16.gmra.mxu0 %v399
  %v599 = vpop.f32.mrf.mxu0
  %v600 = vadd.f32 0.0, %v599
  %v601 = vpop.f32.mrf.mxu0
  %v602 = vadd.f32 0.0, %v601
  %v603 = vpop.f32.mrf.mxu0
  %v604 = vpop.f32.mrf.mxu0
  %605 = vdwg.mxu0
  %606 = vmatprep.subr.bf16.mxu0 0
  %607 = vmatpush1.bf16.msra.mxu0 0
  %608 = vmatprep.subr.bf16.mxu0 0
  %609 = vmatpush1.bf16.msra.mxu0 0
  %610 = vmatprep.subr.bf16.mxu0 0
  %611 = vmatpush1.bf16.msra.mxu0 0
  %612 = vmatprep.subr.bf16.mxu0 0
  %613 = vmatpush1.bf16.msra.mxu0 0
  %614 = vmatprep.subr.bf16.mxu0 %v328
  %615 = vmatpush1.bf16.msra.mxu0 %v327
  %616 = vmatprep.subr.bf16.mxu0 %v312
  %617 = vmatpush1.bf16.msra.mxu0 %v311
  %618 = vmatprep.subr.bf16.mxu0 %v296
  %619 = vmatpush1.bf16.msra.mxu0 %v295
  %620 = vmatprep.subr.bf16.mxu0 %v280
  %621 = vmatpush1.bf16.msra.mxu0 %v279
  %622 = vmatprep.subr.bf16.mxu0 0
  %623 = vmatpush2.bf16.msra.mxu0 0
  %624 = vmatprep.subr.bf16.mxu0 0
  %625 = vmatpush2.bf16.msra.mxu0 0
  %626 = vmatprep.subr.bf16.mxu0 0
  %627 = vmatpush2.bf16.msra.mxu0 0
  %628 = vmatprep.subr.bf16.mxu0 0
  %629 = vmatpush2.bf16.msra.mxu0 0
  %630 = vmatprep.subr.bf16.mxu0 0
  %631 = vmatpush2.bf16.msra.mxu0 0
  %632 = vmatprep.subr.bf16.mxu0 0
  %633 = vmatpush2.bf16.msra.mxu0 0
  %634 = vmatprep.subr.bf16.mxu0 0
  %635 = vmatpush2.bf16.msra.mxu0 0
  %636 = vmatprep.subr.bf16.mxu0 0
  %637 = vmatpush2.bf16.msra.mxu0 0
  %638 = vmatprep.mubr.bf16.mxu0 0
  %639 = vmatmul.mubr.bf16.gmra.mxu0 %v399
  %v640 = vpop.f32.mrf.mxu0
  %v641 = vadd.f32 0.0, %v640
  %v642 = vpop.f32.mrf.mxu0
  %v643 = vadd.f32 0.0, %v642
  %v644 = vpop.f32.mrf.mxu0
  %v645 = vpop.f32.mrf.mxu0
  %646 = vdwg.mxu0
  %647 = vmatprep.subr.bf16.mxu0 0
  %648 = vmatpush1.bf16.msra.mxu0 0
  %649 = vmatprep.subr.bf16.mxu0 0
  %650 = vmatpush1.bf16.msra.mxu0 0
  %651 = vmatprep.subr.bf16.mxu0 0
  %652 = vmatpush1.bf16.msra.mxu0 0
  %653 = vmatprep.subr.bf16.mxu0 0
  %654 = vmatpush1.bf16.msra.mxu0 0
  %655 = vmatprep.subr.bf16.mxu0 %v330
  %656 = vmatpush1.bf16.msra.mxu0 %v329
  %657 = vmatprep.subr.bf16.mxu0 %v314
  %658 = vmatpush1.bf16.msra.mxu0 %v313
  %659 = vmatprep.subr.bf16.mxu0 %v298
  %660 = vmatpush1.bf16.msra.mxu0 %v297
  %661 = vmatprep.subr.bf16.mxu0 %v282
  %662 = vmatpush1.bf16.msra.mxu0 %v281
  %663 = vmatprep.subr.bf16.mxu0 0
  %664 = vmatpush2.bf16.msra.mxu0 0
  %665 = vmatprep.subr.bf16.mxu0 0
  %666 = vmatpush2.bf16.msra.mxu0 0
  %667 = vmatprep.subr.bf16.mxu0 0
  %668 = vmatpush2.bf16.msra.mxu0 0
  %669 = vmatprep.subr.bf16.mxu0 0
  %670 = vmatpush2.bf16.msra.mxu0 0
  %671 = vmatprep.subr.bf16.mxu0 0
  %672 = vmatpush2.bf16.msra.mxu0 0
  %673 = vmatprep.subr.bf16.mxu0 0
  %674 = vmatpush2.bf16.msra.mxu0 0
  %675 = vmatprep.subr.bf16.mxu0 0
  %676 = vmatpush2.bf16.msra.mxu0 0
  %677 = vmatprep.subr.bf16.mxu0 0
  %678 = vmatpush2.bf16.msra.mxu0 0
  %679 = vmatprep.mubr.bf16.mxu0 0
  %680 = vmatmul.mubr.bf16.gmra.mxu0 %v399
  %v681 = vpop.f32.mrf.mxu0
  %v682 = vadd.f32 0.0, %v681
  %v683 = vpop.f32.mrf.mxu0
  %v684 = vadd.f32 0.0, %v683
  %v685 = vpop.f32.mrf.mxu0
  %v686 = vpop.f32.mrf.mxu0
  %687 = vdwg.mxu0
  %688 = vmatprep.subr.bf16.mxu0 0
  %689 = vmatpush1.bf16.msra.mxu0 0
  %690 = vmatprep.subr.bf16.mxu0 0
  %691 = vmatpush1.bf16.msra.mxu0 0
  %692 = vmatprep.subr.bf16.mxu0 0
  %693 = vmatpush1.bf16.msra.mxu0 0
  %694 = vmatprep.subr.bf16.mxu0 0
  %695 = vmatpush1.bf16.msra.mxu0 0
  %696 = vmatprep.subr.bf16.mxu0 %v332
  %697 = vmatpush1.bf16.msra.mxu0 %v331
  %698 = vmatprep.subr.bf16.mxu0 %v316
  %699 = vmatpush1.bf16.msra.mxu0 %v315
  %700 = vmatprep.subr.bf16.mxu0 %v300
  %701 = vmatpush1.bf16.msra.mxu0 %v299
  %702 = vmatprep.subr.bf16.mxu0 %v284
  %703 = vmatpush1.bf16.msra.mxu0 %v283
  %704 = vmatprep.subr.bf16.mxu0 0
  %705 = vmatpush2.bf16.msra.mxu0 0
  %706 = vmatprep.subr.bf16.mxu0 0
  %707 = vmatpush2.bf16.msra.mxu0 0
  %708 = vmatprep.subr.bf16.mxu0 0
  %709 = vmatpush2.bf16.msra.mxu0 0
  %710 = vmatprep.subr.bf16.mxu0 0
  %711 = vmatpush2.bf16.msra.mxu0 0
  %712 = vmatprep.subr.bf16.mxu0 0
  %713 = vmatpush2.bf16.msra.mxu0 0
  %714 = vmatprep.subr.bf16.mxu0 0
  %715 = vmatpush2.bf16.msra.mxu0 0
  %716 = vmatprep.subr.bf16.mxu0 0
  %717 = vmatpush2.bf16.msra.mxu0 0
  %718 = vmatprep.subr.bf16.mxu0 0
  %719 = vmatpush2.bf16.msra.mxu0 0
  %720 = vmatprep.mubr.bf16.mxu0 0
  %721 = vmatmul.mubr.bf16.gmra.mxu0 %v399
  %v722 = vpop.f32.mrf.mxu0
  %v723 = vadd.f32 0.0, %v722
  %v724 = vpop.f32.mrf.mxu0
  %v725 = vadd.f32 0.0, %v724
  %v726 = vpop.f32.mrf.mxu0
  %v727 = vpop.f32.mrf.mxu0
  %728 = vdwg.mxu0
  %729 = vst [vmem:[%s2] sm:$0xff] %v436
  %730 = vst [vmem:[%s2 + $0x8] sm:$0xff] %v438
  %731 = vst [vmem:[%s2 + $0x10] sm:$0xff] %v477
  %732 = vst [vmem:[%s2 + $0x18] sm:$0xff] %v479
  %733 = vst [vmem:[%s2 + $0x20] sm:$0xff] %v518
  %734 = vst [vmem:[%s2 + $0x28] sm:$0xff] %v520
  %735 = vst [vmem:[%s2 + $0x30] sm:$0xff] %v559
  %736 = vst [vmem:[%s2 + $0x38] sm:$0xff] %v561
  %737 = vst [vmem:[%s2 + $0x40] sm:$0xff] %v600
  %738 = vst [vmem:[%s2 + $0x48] sm:$0xff] %v602
  %739 = vst [vmem:[%s2 + $0x50] sm:$0xff] %v641
  %740 = vst [vmem:[%s2 + $0x58] sm:$0xff] %v643
  %741 = vst [vmem:[%s2 + $0x60] sm:$0xff] %v682
  %742 = vst [vmem:[%s2 + $0x68] sm:$0xff] %v684
  %743 = vst [vmem:[%s2 + $0x70] sm:$0xff] %v723
  %744 = vst [vmem:[%s2 + $0x78] sm:$0xff] %v725
  // Predicated region
  $region10: #{encoder_forward.6} parent=0 // pred_check
    _
  $region11: #{encoder_forward.6} parent=0 // pred_check_branch
    %746 = sbr.rel (0) target = $region13
  $region12: #{encoder_forward.6} parent=0 // pred_region
    _
  $region13: #{encoder_forward.6} parent=0 // pred_fallthru
    _
  // Predicated region
  $region14: #{encoder_forward.6} parent=0 // pred_check
    _
  $region15: #{encoder_forward.6} parent=0 // pred_check_branch
    %748 = sbr.rel (0) target = $region17
  $region16: #{encoder_forward.6} parent=0 // pred_region
    _
  $region17: #{encoder_forward.6} parent=0 // pred_fallthru
    _

// kernel: encoder_forward.7
$region0: #{encoder_forward.7}
  #allocation0 [shape = 'u32[]', space=smem, size = 0x4, offset = 0x4, fixed_abs, tag = 'smem constant byte address 0x4 - core index']
  #allocation1 [shape = 'u32[144,128]{1,0:T(1,128)}', space=vmem, size = 0x12000, scoped, tag = 'internal scratch']
  %s0 = inlined_call_operand.vmem [shape: bf16[128,512], index: 0, kind: input, shape index: {}]
  %s1 = inlined_call_operand.vmem [shape: bf16[16,128], index: 1, kind: input, shape index: {}]
  %s2 = inlined_call_operand.vmem [shape: f32[16,512], index: 2, kind: output, shape index: {}]
  %s3 = sld [smem:[#allocation0]]
  $region18: #{encoder_forward.7} parent=0
    _
  %s5 = ssub.s32 1, %s3
  %s6 = scalar_select 0, %s5, %s3
  // Predicated region
  $region2: #{encoder_forward.7} parent=0 // pred_check
    _
  $region3: #{encoder_forward.7} parent=0 // pred_check_branch
    %8 = sbr.rel (0) target = $region5
  $region4: #{encoder_forward.7} parent=0 // pred_region
    _
  $region5: #{encoder_forward.7} parent=0 // pred_fallthru
    _
  // Predicated region
  $region6: #{encoder_forward.7} parent=0 // pred_check
    _
  $region7: #{encoder_forward.7} parent=0 // pred_check_branch
    %10 = sbr.rel (0) target = $region9
  $region8: #{encoder_forward.7} parent=0 // pred_region
    _
  $region9: #{encoder_forward.7} parent=0 // pred_fallthru
    _
  %v12 = vld [vmem:[%s1] sm:$0xf]
  %v13 = vld [vmem:[%s1 + $0x4] sm:$0xf]
  %v14 = vld [vmem:[%s0] sm:$0xff]
  %v15 = vld [vmem:[%s0 + $0x8] sm:$0xff]
  %v16 = vld [vmem:[%s0 + $0x10] sm:$0xff]
  %v17 = vld [vmem:[%s0 + $0x18] sm:$0xff]
  %v18 = vld [vmem:[%s0 + $0x20] sm:$0xff]
  %v19 = vld [vmem:[%s0 + $0x28] sm:$0xff]
  %v20 = vld [vmem:[%s0 + $0x30] sm:$0xff]
  %v21 = vld [vmem:[%s0 + $0x38] sm:$0xff]
  %v22 = vld [vmem:[%s0 + $0x40] sm:$0xff]
  %v23 = vld [vmem:[%s0 + $0x48] sm:$0xff]
  %v24 = vld [vmem:[%s0 + $0x50] sm:$0xff]
  %v25 = vld [vmem:[%s0 + $0x58] sm:$0xff]
  %v26 = vld [vmem:[%s0 + $0x60] sm:$0xff]
  %v27 = vld [vmem:[%s0 + $0x68] sm:$0xff]
  %v28 = vld [vmem:[%s0 + $0x70] sm:$0xff]
  %v29 = vld [vmem:[%s0 + $0x78] sm:$0xff]
  %v30 = vld [vmem:[%s0 + $0x80] sm:$0xff]
  %v31 = vld [vmem:[%s0 + $0x88] sm:$0xff]
  %v32 = vld [vmem:[%s0 + $0x90] sm:$0xff]
  %v33 = vld [vmem:[%s0 + $0x98] sm:$0xff]
  %v34 = vld [vmem:[%s0 + $0xa0] sm:$0xff]
  %v35 = vld [vmem:[%s0 + $0xa8] sm:$0xff]
  %v36 = vld [vmem:[%s0 + $0xb0] sm:$0xff]
  %v37 = vld [vmem:[%s0 + $0xb8] sm:$0xff]
  %v38 = vld [vmem:[%s0 + $0xc0] sm:$0xff]
  %v39 = vld [vmem:[%s0 + $0xc8] sm:$0xff]
  %v40 = vld [vmem:[%s0 + $0xd0] sm:$0xff]
  %v41 = vld [vmem:[%s0 + $0xd8] sm:$0xff]
  %v42 = vld [vmem:[%s0 + $0xe0] sm:$0xff]
  %v43 = vld [vmem:[%s0 + $0xe8] sm:$0xff]
  %v44 = vld [vmem:[%s0 + $0xf0] sm:$0xff]
  %v45 = vld [vmem:[%s0 + $0xf8] sm:$0xff]
  %v48 = vunpack.c.l.b16 %v12
  %v49 = vunpack.c.l.b16 %v13
  %v50 = vpack.c.b16 %v49, %v48
  %v84 = vunpack.c.l.b16 %v14
  %v85 = vunpack.c.h.b16 %v14
  %v86 = vunpack.c.l.b16 %v15
  %v87 = vunpack.c.h.b16 %v15
  %v88 = vunpack.c.l.b16 %v16
  %v89 = vunpack.c.h.b16 %v16
  %v90 = vunpack.c.l.b16 %v17
  %v91 = vunpack.c.h.b16 %v17
  %v92 = vunpack.c.l.b16 %v18
  %v93 = vunpack.c.h.b16 %v18
  %v94 = vunpack.c.l.b16 %v19
  %v95 = vunpack.c.h.b16 %v19
  %v96 = vunpack.c.l.b16 %v20
  %v97 = vunpack.c.h.b16 %v20
  %v98 = vunpack.c.l.b16 %v21
  %v99 = vunpack.c.h.b16 %v21
  %v100 = vunpack.c.l.b16 %v22
  %v101 = vunpack.c.h.b16 %v22
  %v102 = vunpack.c.l.b16 %v23
  %v103 = vunpack.c.h.b16 %v23
  %v104 = vunpack.c.l.b16 %v24
  %v105 = vunpack.c.h.b16 %v24
  %v106 = vunpack.c.l.b16 %v25
  %v107 = vunpack.c.h.b16 %v25
  %v108 = vunpack.c.l.b16 %v26
  %v109 = vunpack.c.h.b16 %v26
  %v110 = vunpack.c.l.b16 %v27
  %v111 = vunpack.c.h.b16 %v27
  %v112 = vunpack.c.l.b16 %v28
  %v113 = vunpack.c.h.b16 %v28
  %v114 = vunpack.c.l.b16 %v29
  %v115 = vunpack.c.h.b16 %v29
  %v116 = vunpack.c.l.b16 %v30
  %v117 = vunpack.c.h.b16 %v30
  %v118 = vunpack.c.l.b16 %v31
  %v119 = vunpack.c.h.b16 %v31
  %v120 = vunpack.c.l.b16 %v32
  %v121 = vunpack.c.h.b16 %v32
  %v122 = vunpack.c.l.b16 %v33
  %v123 = vunpack.c.h.b16 %v33
  %v124 = vunpack.c.l.b16 %v34
  %v125 = vunpack.c.h.b16 %v34
  %v126 = vunpack.c.l.b16 %v35
  %v127 = vunpack.c.h.b16 %v35
  %v128 = vunpack.c.l.b16 %v36
  %v129 = vunpack.c.h.b16 %v36
  %v130 = vunpack.c.l.b16 %v37
  %v131 = vunpack.c.h.b16 %v37
  %v132 = vunpack.c.l.b16 %v38
  %v133 = vunpack.c.h.b16 %v38
  %v134 = vunpack.c.l.b16 %v39
  %v135 = vunpack.c.h.b16 %v39
  %v136 = vunpack.c.l.b16 %v40
  %v137 = vunpack.c.h.b16 %v40
  %v138 = vunpack.c.l.b16 %v41
  %v139 = vunpack.c.h.b16 %v41
  %v140 = vunpack.c.l.b16 %v42
  %v141 = vunpack.c.h.b16 %v42
  %v142 = vunpack.c.l.b16 %v43
  %v143 = vunpack.c.h.b16 %v43
  %v144 = vunpack.c.l.b16 %v44
  %v145 = vunpack.c.h.b16 %v44
  %v146 = vunpack.c.l.b16 %v45
  %v147 = vunpack.c.h.b16 %v45
  %v148 = vpack.c.b16 %v88, %v84
  %v149 = vpack.c.b16 %v89, %v85
  %v150 = vpack.c.b16 %v90, %v86
  %v151 = vpack.c.b16 %v91, %v87
  %v152 = vpack.c.b16 %v96, %v92
  %v153 = vpack.c.b16 %v97, %v93
  %v154 = vpack.c.b16 %v98, %v94
  %v155 = vpack.c.b16 %v99, %v95
  %v156 = vpack.c.b16 %v104, %v100
  %v157 = vpack.c.b16 %v105, %v101
  %v158 = vpack.c.b16 %v106, %v102
  %v159 = vpack.c.b16 %v107, %v103
  %v160 = vpack.c.b16 %v112, %v108
  %v161 = vpack.c.b16 %v113, %v109
  %v162 = vpack.c.b16 %v114, %v110
  %v163 = vpack.c.b16 %v115, %v111
  %v164 = vpack.c.b16 %v120, %v116
  %v165 = vpack.c.b16 %v121, %v117
  %v166 = vpack.c.b16 %v122, %v118
  %v167 = vpack.c.b16 %v123, %v119
  %v168 = vpack.c.b16 %v128, %v124
  %v169 = vpack.c.b16 %v129, %v125
  %v170 = vpack.c.b16 %v130, %v126
  %v171 = vpack.c.b16 %v131, %v127
  %v172 = vpack.c.b16 %v136, %v132
  %v173 = vpack.c.b16 %v137, %v133
  %v174 = vpack.c.b16 %v138, %v134
  %v175 = vpack.c.b16 %v139, %v135
  %v176 = vpack.c.b16 %v144, %v140
  %v177 = vpack.c.b16 %v145, %v141
  %v178 = vpack.c.b16 %v146, %v142
  %v179 = vpack.c.b16 %v147, %v143
  %212 = vmatprep.subr.bf16.mxu0 %v177
  %213 = vmatpush1.bf16.msra.mxu0 %v176
  %214 = vmatprep.subr.bf16.mxu0 %v173
  %215 = vmatpush1.bf16.msra.mxu0 %v172
  %216 = vmatprep.subr.bf16.mxu0 %v169
  %217 = vmatpush1.bf16.msra.mxu0 %v168
  %218 = vmatprep.subr.bf16.mxu0 %v165
  %219 = vmatpush1.bf16.msra.mxu0 %v164
  %220 = vmatprep.subr.bf16.mxu0 %v161
  %221 = vmatpush1.bf16.msra.mxu0 %v160
  %222 = vmatprep.subr.bf16.mxu0 %v157
  %223 = vmatpush1.bf16.msra.mxu0 %v156
  %224 = vmatprep.subr.bf16.mxu0 %v153
  %225 = vmatpush1.bf16.msra.mxu0 %v152
  %226 = vmatprep.subr.bf16.mxu0 %v149
  %227 = vmatpush1.bf16.msra.mxu0 %v148
  %228 = vmatprep.subr.bf16.mxu0 0
  %229 = vmatpush2.bf16.msra.mxu0 0
  %230 = vmatprep.subr.bf16.mxu0 0
  %231 = vmatpush2.bf16.msra.mxu0 0
  %232 = vmatprep.subr.bf16.mxu0 0
  %233 = vmatpush2.bf16.msra.mxu0 0
  %234 = vmatprep.subr.bf16.mxu0 0
  %235 = vmatpush2.bf16.msra.mxu0 0
  %236 = vmatprep.subr.bf16.mxu0 0
  %237 = vmatpush2.bf16.msra.mxu0 0
  %238 = vmatprep.subr.bf16.mxu0 0
  %239 = vmatpush2.bf16.msra.mxu0 0
  %240 = vmatprep.subr.bf16.mxu0 0
  %241 = vmatpush2.bf16.msra.mxu0 0
  %242 = vmatprep.subr.bf16.mxu0 0
  %243 = vmatpush2.bf16.msra.mxu0 0
  %244 = vmatprep.mubr.bf16.mxu0 0
  %245 = vmatmul.mubr.bf16.gmra.mxu0 %v50
  %v246 = vpop.f32.mrf.mxu0
  %v247 = vadd.f32 0.0, %v246
  %v248 = vpop.f32.mrf.mxu0
  %v249 = vadd.f32 0.0, %v248
  %v250 = vpop.f32.mrf.mxu0
  %v251 = vadd.f32 0.0, %v250
  %v252 = vpop.f32.mrf.mxu0
  %v253 = vadd.f32 0.0, %v252
  %254 = vdwg.mxu0
  %255 = vmatprep.subr.bf16.mxu0 %v179
  %256 = vmatpush1.bf16.msra.mxu0 %v178
  %257 = vmatprep.subr.bf16.mxu0 %v175
  %258 = vmatpush1.bf16.msra.mxu0 %v174
  %259 = vmatprep.subr.bf16.mxu0 %v171
  %260 = vmatpush1.bf16.msra.mxu0 %v170
  %261 = vmatprep.subr.bf16.mxu0 %v167
  %262 = vmatpush1.bf16.msra.mxu0 %v166
  %263 = vmatprep.subr.bf16.mxu0 %v163
  %264 = vmatpush1.bf16.msra.mxu0 %v162
  %265 = vmatprep.subr.bf16.mxu0 %v159
  %266 = vmatpush1.bf16.msra.mxu0 %v158
  %267 = vmatprep.subr.bf16.mxu0 %v155
  %268 = vmatpush1.bf16.msra.mxu0 %v154
  %269 = vmatprep.subr.bf16.mxu0 %v151
  %270 = vmatpush1.bf16.msra.mxu0 %v150
  %271 = vmatprep.subr.bf16.mxu0 0
  %272 = vmatpush2.bf16.msra.mxu0 0
  %273 = vmatprep.subr.bf16.mxu0 0
  %274 = vmatpush2.bf16.msra.mxu0 0
  %275 = vmatprep.subr.bf16.mxu0 0
  %276 = vmatpush2.bf16.msra.mxu0 0
  %277 = vmatprep.subr.bf16.mxu0 0
  %278 = vmatpush2.bf16.msra.mxu0 0
  %279 = vmatprep.subr.bf16.mxu0 0
  %280 = vmatpush2.bf16.msra.mxu0 0
  %281 = vmatprep.subr.bf16.mxu0 0
  %282 = vmatpush2.bf16.msra.mxu0 0
  %283 = vmatprep.subr.bf16.mxu0 0
  %284 = vmatpush2.bf16.msra.mxu0 0
  %285 = vmatprep.subr.bf16.mxu0 0
  %286 = vmatpush2.bf16.msra.mxu0 0
  %287 = vmatprep.mubr.bf16.mxu0 0
  %288 = vmatmul.mubr.bf16.gmra.mxu0 %v50
  %v289 = vpop.f32.mrf.mxu0
  %v290 = vadd.f32 0.0, %v289
  %v291 = vpop.f32.mrf.mxu0
  %v292 = vadd.f32 0.0, %v291
  %v293 = vpop.f32.mrf.mxu0
  %v294 = vadd.f32 0.0, %v293
  %v295 = vpop.f32.mrf.mxu0
  %v296 = vadd.f32 0.0, %v295
  %297 = vdwg.mxu0
  %298 = vst [vmem:[%s2] sm:$0xff] %v247
  %299 = vst [vmem:[%s2 + $0x8] sm:$0xff] %v249
  %300 = vst [vmem:[%s2 + $0x10] sm:$0xff] %v290
  %301 = vst [vmem:[%s2 + $0x18] sm:$0xff] %v292
  %302 = vst [vmem:[%s2 + $0x20] sm:$0xff] %v251
  %303 = vst [vmem:[%s2 + $0x28] sm:$0xff] %v253
  %304 = vst [vmem:[%s2 + $0x30] sm:$0xff] %v294
  %305 = vst [vmem:[%s2 + $0x38] sm:$0xff] %v296
  // Predicated region
  $region10: #{encoder_forward.7} parent=0 // pred_check
    _
  $region11: #{encoder_forward.7} parent=0 // pred_check_branch
    %307 = sbr.rel (0) target = $region13
  $region12: #{encoder_forward.7} parent=0 // pred_region
    _
  $region13: #{encoder_forward.7} parent=0 // pred_fallthru
    _
  // Predicated region
  $region14: #{encoder_forward.7} parent=0 // pred_check
    _
  $region15: #{encoder_forward.7} parent=0 // pred_check_branch
    %309 = sbr.rel (0) target = $region17
  $region16: #{encoder_forward.7} parent=0 // pred_region
    _
  $region17: #{encoder_forward.7} parent=0 // pred_fallthru
    _

// kernel: encoder_forward.8
$region0: #{encoder_forward.8}
  #allocation0 [shape = 'u32[]', space=smem, size = 0x4, offset = 0x4, fixed_abs, tag = 'smem constant byte address 0x4 - core index']
  #allocation1 [shape = 'u32[144,128]{1,0:T(1,128)}', space=vmem, size = 0x12000, scoped, tag = 'internal scratch']
  %s0 = inlined_call_operand.vmem [shape: bf16[256,128], index: 0, kind: input, shape index: {}]
  %s1 = inlined_call_operand.vmem [shape: bf16[32,256], index: 1, kind: input, shape index: {}]
  %s2 = inlined_call_operand.vmem [shape: f32[32,128], index: 2, kind: output, shape index: {}]
  %s3 = sld [smem:[#allocation0]]
  $region18: #{encoder_forward.8} parent=0
    _
  %s5 = ssub.s32 1, %s3
  %s6 = scalar_select 0, %s5, %s3
  // Predicated region
  $region2: #{encoder_forward.8} parent=0 // pred_check
    _
  $region3: #{encoder_forward.8} parent=0 // pred_check_branch
    %8 = sbr.rel (0) target = $region5
  $region4: #{encoder_forward.8} parent=0 // pred_region
    _
  $region5: #{encoder_forward.8} parent=0 // pred_fallthru
    _
  // Predicated region
  $region6: #{encoder_forward.8} parent=0 // pred_check
    _
  $region7: #{encoder_forward.8} parent=0 // pred_check_branch
    %10 = sbr.rel (0) target = $region9
  $region8: #{encoder_forward.8} parent=0 // pred_region
    _
  $region9: #{encoder_forward.8} parent=0 // pred_fallthru
    _
  %v12 = vld [vmem:[%s1] sm:$0xff]
  %v13 = vld [vmem:[%s1 + $0x8] sm:$0xff]
  %v14 = vld [vmem:[%s1 + $0x10] sm:$0xff]
  %v15 = vld [vmem:[%s1 + $0x18] sm:$0xff]
  %v16 = vld [vmem:[%s0] sm:$0xf]
  %v17 = vld [vmem:[%s0 + $0x4] sm:$0xf]
  %v18 = vld [vmem:[%s0 + $0x8] sm:$0xf]
  %v19 = vld [vmem:[%s0 + $0xc] sm:$0xf]
  %v20 = vld [vmem:[%s0 + $0x10] sm:$0xf]
  %v21 = vld [vmem:[%s0 + $0x14] sm:$0xf]
  %v22 = vld [vmem:[%s0 + $0x18] sm:$0xf]
  %v23 = vld [vmem:[%s0 + $0x1c] sm:$0xf]
  %v24 = vld [vmem:[%s0 + $0x20] sm:$0xf]
  %v25 = vld [vmem:[%s0 + $0x24] sm:$0xf]
  %v26 = vld [vmem:[%s0 + $0x28] sm:$0xf]
  %v27 = vld [vmem:[%s0 + $0x2c] sm:$0xf]
  %v28 = vld [vmem:[%s0 + $0x30] sm:$0xf]
  %v29 = vld [vmem:[%s0 + $0x34] sm:$0xf]
  %v30 = vld [vmem:[%s0 + $0x38] sm:$0xf]
  %v31 = vld [vmem:[%s0 + $0x3c] sm:$0xf]
  %v32 = vld [vmem:[%s0 + $0x40] sm:$0xf]
  %v33 = vld [vmem:[%s0 + $0x44] sm:$0xf]
  %v34 = vld [vmem:[%s0 + $0x48] sm:$0xf]
  %v35 = vld [vmem:[%s0 + $0x4c] sm:$0xf]
  %v36 = vld [vmem:[%s0 + $0x50] sm:$0xf]
  %v37 = vld [vmem:[%s0 + $0x54] sm:$0xf]
  %v38 = vld [vmem:[%s0 + $0x58] sm:$0xf]
  %v39 = vld [vmem:[%s0 + $0x5c] sm:$0xf]
  %v40 = vld [vmem:[%s0 + $0x60] sm:$0xf]
  %v41 = vld [vmem:[%s0 + $0x64] sm:$0xf]
  %v42 = vld [vmem:[%s0 + $0x68] sm:$0xf]
  %v43 = vld [vmem:[%s0 + $0x6c] sm:$0xf]
  %v44 = vld [vmem:[%s0 + $0x70] sm:$0xf]
  %v45 = vld [vmem:[%s0 + $0x74] sm:$0xf]
  %v46 = vld [vmem:[%s0 + $0x78] sm:$0xf]
  %v47 = vld [vmem:[%s0 + $0x7c] sm:$0xf]
  %v52 = vunpack.c.l.b16 %v12
  %v53 = vunpack.c.h.b16 %v12
  %v54 = vunpack.c.l.b16 %v13
  %v55 = vunpack.c.h.b16 %v13
  %v56 = vunpack.c.l.b16 %v14
  %v57 = vunpack.c.h.b16 %v14
  %v58 = vunpack.c.l.b16 %v15
  %v59 = vunpack.c.h.b16 %v15
  %v60 = vpack.c.b16 %v54, %v52
  %v61 = vpack.c.b16 %v55, %v53
  %v62 = vpack.c.b16 %v58, %v56
  %v63 = vpack.c.b16 %v59, %v57
  %v100 = vunpack.c.l.b16 %v16
  %v101 = vunpack.c.l.b16 %v17
  %v102 = vunpack.c.l.b16 %v18
  %v103 = vunpack.c.l.b16 %v19
  %v104 = vunpack.c.l.b16 %v20
  %v105 = vunpack.c.l.b16 %v21
  %v106 = vunpack.c.l.b16 %v22
  %v107 = vunpack.c.l.b16 %v23
  %v108 = vunpack.c.l.b16 %v24
  %v109 = vunpack.c.l.b16 %v25
  %v110 = vunpack.c.l.b16 %v26
  %v111 = vunpack.c.l.b16 %v27
  %v112 = vunpack.c.l.b16 %v28
  %v113 = vunpack.c.l.b16 %v29
  %v114 = vunpack.c.l.b16 %v30
  %v115 = vunpack.c.l.b16 %v31
  %v116 = vunpack.c.l.b16 %v32
  %v117 = vunpack.c.l.b16 %v33
  %v118 = vunpack.c.l.b16 %v34
  %v119 = vunpack.c.l.b16 %v35
  %v120 = vunpack.c.l.b16 %v36
  %v121 = vunpack.c.l.b16 %v37
  %v122 = vunpack.c.l.b16 %v38
  %v123 = vunpack.c.l.b16 %v39
  %v124 = vunpack.c.l.b16 %v40
  %v125 = vunpack.c.l.b16 %v41
  %v126 = vunpack.c.l.b16 %v42
  %v127 = vunpack.c.l.b16 %v43
  %v128 = vunpack.c.l.b16 %v44
  %v129 = vunpack.c.l.b16 %v45
  %v130 = vunpack.c.l.b16 %v46
  %v131 = vunpack.c.l.b16 %v47
  %v132 = vpack.c.b16 %v101, %v100
  %v133 = vpack.c.b16 %v103, %v102
  %v134 = vpack.c.b16 %v105, %v104
  %v135 = vpack.c.b16 %v107, %v106
  %v136 = vpack.c.b16 %v109, %v108
  %v137 = vpack.c.b16 %v111, %v110
  %v138 = vpack.c.b16 %v113, %v112
  %v139 = vpack.c.b16 %v115, %v114
  %v140 = vpack.c.b16 %v117, %v116
  %v141 = vpack.c.b16 %v119, %v118
  %v142 = vpack.c.b16 %v121, %v120
  %v143 = vpack.c.b16 %v123, %v122
  %v144 = vpack.c.b16 %v125, %v124
  %v145 = vpack.c.b16 %v127, %v126
  %v146 = vpack.c.b16 %v129, %v128
  %v147 = vpack.c.b16 %v131, %v130
  %164 = vmatprep.subr.bf16.mxu0 0
  %165 = vmatpush1.bf16.msra.mxu0 %v139
  %166 = vmatprep.subr.bf16.mxu0 0
  %167 = vmatpush1.bf16.msra.mxu0 %v138
  %168 = vmatprep.subr.bf16.mxu0 0
  %169 = vmatpush1.bf16.msra.mxu0 %v137
  %170 = vmatprep.subr.bf16.mxu0 0
  %171 = vmatpush1.bf16.msra.mxu0 %v136
  %172 = vmatprep.subr.bf16.mxu0 0
  %173 = vmatpush1.bf16.msra.mxu0 %v135
  %174 = vmatprep.subr.bf16.mxu0 0
  %175 = vmatpush1.bf16.msra.mxu0 %v134
  %176 = vmatprep.subr.bf16.mxu0 0
  %177 = vmatpush1.bf16.msra.mxu0 %v133
  %178 = vmatprep.subr.bf16.mxu0 0
  %179 = vmatpush1.bf16.msra.mxu0 %v132
  %180 = vmatprep.subr.bf16.mxu0 0
  %181 = vmatpush2.bf16.msra.mxu0 %v147
  %182 = vmatprep.subr.bf16.mxu0 0
  %183 = vmatpush2.bf16.msra.mxu0 %v146
  %184 = vmatprep.subr.bf16.mxu0 0
  %185 = vmatpush2.bf16.msra.mxu0 %v145
  %186 = vmatprep.subr.bf16.mxu0 0
  %187 = vmatpush2.bf16.msra.mxu0 %v144
  %188 = vmatprep.subr.bf16.mxu0 0
  %189 = vmatpush2.bf16.msra.mxu0 %v143
  %190 = vmatprep.subr.bf16.mxu0 0
  %191 = vmatpush2.bf16.msra.mxu0 %v142
  %192 = vmatprep.subr.bf16.mxu0 0
  %193 = vmatpush2.bf16.msra.mxu0 %v141
  %194 = vmatprep.subr.bf16.mxu0 0
  %195 = vmatpush2.bf16.msra.mxu0 %v140
  %196 = vmatprep.mubr.bf16.mxu0 %v61
  %197 = vmatmul.mubr.bf16.gmra.mxu0 %v60
  %v198 = vpop.f32.mrf.mxu0
  %v199 = vadd.f32 0.0, %v198
  %v200 = vpop.f32.mrf.mxu0
  %v201 = vpop.f32.mrf.mxu0
  %v202 = vadd.f32 0.0, %v201
  %v203 = vpop.f32.mrf.mxu0
  %204 = vmatprep.mubr.bf16.mxu0 %v63
  %205 = vmatmul.mubr.bf16.gmra.mxu0 %v62
  %v206 = vpop.f32.mrf.mxu0
  %v207 = vadd.f32 0.0, %v206
  %v208 = vpop.f32.mrf.mxu0
  %v209 = vpop.f32.mrf.mxu0
  %v210 = vadd.f32 0.0, %v209
  %v211 = vpop.f32.mrf.mxu0
  %212 = vdwg.mxu0
  %213 = vst [vmem:[%s2] sm:$0xff] %v199
  %214 = vst [vmem:[%s2 + $0x8] sm:$0xff] %v202
  %215 = vst [vmem:[%s2 + $0x10] sm:$0xff] %v207
  %216 = vst [vmem:[%s2 + $0x18] sm:$0xff] %v210
  // Predicated region
  $region10: #{encoder_forward.8} parent=0 // pred_check
    _
  $region11: #{encoder_forward.8} parent=0 // pred_check_branch
    %218 = sbr.rel (0) target = $region13
  $region12: #{encoder_forward.8} parent=0 // pred_region
    _
  $region13: #{encoder_forward.8} parent=0 // pred_fallthru
    _
  // Predicated region
  $region14: #{encoder_forward.8} parent=0 // pred_check
    _
  $region15: #{encoder_forward.8} parent=0 // pred_check_branch
    %220 = sbr.rel (0) target = $region17
  $region16: #{encoder_forward.8} parent=0 // pred_region
    _
  $region17: #{encoder_forward.8} parent=0 // pred_fallthru
    _

// kernel: encoder_forward.9
$region0: #{encoder_forward.9}
  #allocation0 [shape = 'u32[]', space=smem, size = 0x4, offset = 0x4, fixed_abs, tag = 'smem constant byte address 0x4 - core index']
  #allocation1 [shape = 'u32[144,128]{1,0:T(1,128)}', space=vmem, size = 0x12000, scoped, tag = 'internal scratch']
  %s0 = inlined_call_operand.vmem [shape: bf16[512,128], index: 0, kind: input, shape index: {}]
  %s1 = inlined_call_operand.vmem [shape: bf16[64,512], index: 1, kind: input, shape index: {}]
  %s2 = inlined_call_operand.vmem [shape: f32[64,128], index: 2, kind: output, shape index: {}]
  %s3 = sld [smem:[#allocation0]]
  $region18: #{encoder_forward.9} parent=0
    _
  %s5 = ssub.s32 1, %s3
  %s6 = scalar_select 0, %s5, %s3
  // Predicated region
  $region2: #{encoder_forward.9} parent=0 // pred_check
    _
  $region3: #{encoder_forward.9} parent=0 // pred_check_branch
    %8 = sbr.rel (0) target = $region5
  $region4: #{encoder_forward.9} parent=0 // pred_region
    _
  $region5: #{encoder_forward.9} parent=0 // pred_fallthru
    _
  // Predicated region
  $region6: #{encoder_forward.9} parent=0 // pred_check
    _
  $region7: #{encoder_forward.9} parent=0 // pred_check_branch
    %10 = sbr.rel (0) target = $region9
  $region8: #{encoder_forward.9} parent=0 // pred_region
    _
  $region9: #{encoder_forward.9} parent=0 // pred_fallthru
    _
  %v12 = vld [vmem:[%s1] sm:$0xff]
  %v13 = vld [vmem:[%s1 + $0x8] sm:$0xff]
  %v14 = vld [vmem:[%s1 + $0x10] sm:$0xff]
  %v15 = vld [vmem:[%s1 + $0x18] sm:$0xff]
  %v16 = vld [vmem:[%s1 + $0x20] sm:$0xff]
  %v17 = vld [vmem:[%s1 + $0x28] sm:$0xff]
  %v18 = vld [vmem:[%s1 + $0x30] sm:$0xff]
  %v19 = vld [vmem:[%s1 + $0x38] sm:$0xff]
  %v20 = vld [vmem:[%s1 + $0x40] sm:$0xff]
  %v21 = vld [vmem:[%s1 + $0x48] sm:$0xff]
  %v22 = vld [vmem:[%s1 + $0x50] sm:$0xff]
  %v23 = vld [vmem:[%s1 + $0x58] sm:$0xff]
  %v24 = vld [vmem:[%s1 + $0x60] sm:$0xff]
  %v25 = vld [vmem:[%s1 + $0x68] sm:$0xff]
  %v26 = vld [vmem:[%s1 + $0x70] sm:$0xff]
  %v27 = vld [vmem:[%s1 + $0x78] sm:$0xff]
  %v28 = vld [vmem:[%s0] sm:$0xf]
  %v29 = vld [vmem:[%s0 + $0x4] sm:$0xf]
  %v30 = vld [vmem:[%s0 + $0x8] sm:$0xf]
  %v31 = vld [vmem:[%s0 + $0xc] sm:$0xf]
  %v32 = vld [vmem:[%s0 + $0x10] sm:$0xf]
  %v33 = vld [vmem:[%s0 + $0x14] sm:$0xf]
  %v34 = vld [vmem:[%s0 + $0x18] sm:$0xf]
  %v35 = vld [vmem:[%s0 + $0x1c] sm:$0xf]
  %v36 = vld [vmem:[%s0 + $0x20] sm:$0xf]
  %v37 = vld [vmem:[%s0 + $0x24] sm:$0xf]
  %v38 = vld [vmem:[%s0 + $0x28] sm:$0xf]
  %v39 = vld [vmem:[%s0 + $0x2c] sm:$0xf]
  %v40 = vld [vmem:[%s0 + $0x30] sm:$0xf]
  %v41 = vld [vmem:[%s0 + $0x34] sm:$0xf]
  %v42 = vld [vmem:[%s0 + $0x38] sm:$0xf]
  %v43 = vld [vmem:[%s0 + $0x3c] sm:$0xf]
  %v44 = vld [vmem:[%s0 + $0x40] sm:$0xf]
  %v45 = vld [vmem:[%s0 + $0x44] sm:$0xf]
  %v46 = vld [vmem:[%s0 + $0x48] sm:$0xf]
  %v47 = vld [vmem:[%s0 + $0x4c] sm:$0xf]
  %v48 = vld [vmem:[%s0 + $0x50] sm:$0xf]
  %v49 = vld [vmem:[%s0 + $0x54] sm:$0xf]
  %v50 = vld [vmem:[%s0 + $0x58] sm:$0xf]
  %v51 = vld [vmem:[%s0 + $0x5c] sm:$0xf]
  %v52 = vld [vmem:[%s0 + $0x60] sm:$0xf]
  %v53 = vld [vmem:[%s0 + $0x64] sm:$0xf]
  %v54 = vld [vmem:[%s0 + $0x68] sm:$0xf]
  %v55 = vld [vmem:[%s0 + $0x6c] sm:$0xf]
  %v56 = vld [vmem:[%s0 + $0x70] sm:$0xf]
  %v57 = vld [vmem:[%s0 + $0x74] sm:$0xf]
  %v58 = vld [vmem:[%s0 + $0x78] sm:$0xf]
  %v59 = vld [vmem:[%s0 + $0x7c] sm:$0xf]
  %v60 = vld [vmem:[%s0 + $0x80] sm:$0xf]
  %v61 = vld [vmem:[%s0 + $0x84] sm:$0xf]
  %v62 = vld [vmem:[%s0 + $0x88] sm:$0xf]
  %v63 = vld [vmem:[%s0 + $0x8c] sm:$0xf]
  %v64 = vld [vmem:[%s0 + $0x90] sm:$0xf]
  %v65 = vld [vmem:[%s0 + $0x94] sm:$0xf]
  %v66 = vld [vmem:[%s0 + $0x98] sm:$0xf]
  %v67 = vld [vmem:[%s0 + $0x9c] sm:$0xf]
  %v68 = vld [vmem:[%s0 + $0xa0] sm:$0xf]
  %v69 = vld [vmem:[%s0 + $0xa4] sm:$0xf]
  %v70 = vld [vmem:[%s0 + $0xa8] sm:$0xf]
  %v71 = vld [vmem:[%s0 + $0xac] sm:$0xf]
  %v72 = vld [vmem:[%s0 + $0xb0] sm:$0xf]
  %v73 = vld [vmem:[%s0 + $0xb4] sm:$0xf]
  %v74 = vld [vmem:[%s0 + $0xb8] sm:$0xf]
  %v75 = vld [vmem:[%s0 + $0xbc] sm:$0xf]
  %v76 = vld [vmem:[%s0 + $0xc0] sm:$0xf]
  %v77 = vld [vmem:[%s0 + $0xc4] sm:$0xf]
  %v78 = vld [vmem:[%s0 + $0xc8] sm:$0xf]
  %v79 = vld [vmem:[%s0 + $0xcc] sm:$0xf]
  %v80 = vld [vmem:[%s0 + $0xd0] sm:$0xf]
  %v81 = vld [vmem:[%s0 + $0xd4] sm:$0xf]
  %v82 = vld [vmem:[%s0 + $0xd8] sm:$0xf]
  %v83 = vld [vmem:[%s0 + $0xdc] sm:$0xf]
  %v84 = vld [vmem:[%s0 + $0xe0] sm:$0xf]
  %v85 = vld [vmem:[%s0 + $0xe4] sm:$0xf]
  %v86 = vld [vmem:[%s0 + $0xe8] sm:$0xf]
  %v87 = vld [vmem:[%s0 + $0xec] sm:$0xf]
  %v88 = vld [vmem:[%s0 + $0xf0] sm:$0xf]
  %v89 = vld [vmem:[%s0 + $0xf4] sm:$0xf]
  %v90 = vld [vmem:[%s0 + $0xf8] sm:$0xf]
  %v91 = vld [vmem:[%s0 + $0xfc] sm:$0xf]
  %v108 = vunpack.c.l.b16 %v12
  %v109 = vunpack.c.h.b16 %v12
  %v110 = vunpack.c.l.b16 %v13
  %v111 = vunpack.c.h.b16 %v13
  %v112 = vunpack.c.l.b16 %v14
  %v113 = vunpack.c.h.b16 %v14
  %v114 = vunpack.c.l.b16 %v15
  %v115 = vunpack.c.h.b16 %v15
  %v116 = vunpack.c.l.b16 %v16
  %v117 = vunpack.c.h.b16 %v16
  %v118 = vunpack.c.l.b16 %v17
  %v119 = vunpack.c.h.b16 %v17
  %v120 = vunpack.c.l.b16 %v18
  %v121 = vunpack.c.h.b16 %v18
  %v122 = vunpack.c.l.b16 %v19
  %v123 = vunpack.c.h.b16 %v19
  %v124 = vunpack.c.l.b16 %v20
  %v125 = vunpack.c.h.b16 %v20
  %v126 = vunpack.c.l.b16 %v21
  %v127 = vunpack.c.h.b16 %v21
  %v128 = vunpack.c.l.b16 %v22
  %v129 = vunpack.c.h.b16 %v22
  %v130 = vunpack.c.l.b16 %v23
  %v131 = vunpack.c.h.b16 %v23
  %v132 = vunpack.c.l.b16 %v24
  %v133 = vunpack.c.h.b16 %v24
  %v134 = vunpack.c.l.b16 %v25
  %v135 = vunpack.c.h.b16 %v25
  %v136 = vunpack.c.l.b16 %v26
  %v137 = vunpack.c.h.b16 %v26
  %v138 = vunpack.c.l.b16 %v27
  %v139 = vunpack.c.h.b16 %v27
  %v140 = vpack.c.b16 %v112, %v108
  %v141 = vpack.c.b16 %v113, %v109
  %v142 = vpack.c.b16 %v114, %v110
  %v143 = vpack.c.b16 %v115, %v111
  %v144 = vpack.c.b16 %v120, %v116
  %v145 = vpack.c.b16 %v121, %v117
  %v146 = vpack.c.b16 %v122, %v118
  %v147 = vpack.c.b16 %v123, %v119
  %v148 = vpack.c.b16 %v128, %v124
  %v149 = vpack.c.b16 %v129, %v125
  %v150 = vpack.c.b16 %v130, %v126
  %v151 = vpack.c.b16 %v131, %v127
  %v152 = vpack.c.b16 %v136, %v132
  %v153 = vpack.c.b16 %v137, %v133
  %v154 = vpack.c.b16 %v138, %v134
  %v155 = vpack.c.b16 %v139, %v135
  %v236 = vunpack.c.l.b16 %v28
  %v237 = vunpack.c.l.b16 %v29
  %v238 = vunpack.c.l.b16 %v30
  %v239 = vunpack.c.l.b16 %v31
  %v240 = vunpack.c.l.b16 %v32
  %v241 = vunpack.c.l.b16 %v33
  %v242 = vunpack.c.l.b16 %v34
  %v243 = vunpack.c.l.b16 %v35
  %v244 = vunpack.c.l.b16 %v36
  %v245 = vunpack.c.l.b16 %v37
  %v246 = vunpack.c.l.b16 %v38
  %v247 = vunpack.c.l.b16 %v39
  %v248 = vunpack.c.l.b16 %v40
  %v249 = vunpack.c.l.b16 %v41
  %v250 = vunpack.c.l.b16 %v42
  %v251 = vunpack.c.l.b16 %v43
  %v252 = vunpack.c.l.b16 %v44
  %v253 = vunpack.c.l.b16 %v45
  %v254 = vunpack.c.l.b16 %v46
  %v255 = vunpack.c.l.b16 %v47
  %v256 = vunpack.c.l.b16 %v48
  %v257 = vunpack.c.l.b16 %v49
  %v258 = vunpack.c.l.b16 %v50
  %v259 = vunpack.c.l.b16 %v51
  %v260 = vunpack.c.l.b16 %v52
  %v261 = vunpack.c.l.b16 %v53
  %v262 = vunpack.c.l.b16 %v54
  %v263 = vunpack.c.l.b16 %v55
  %v264 = vunpack.c.l.b16 %v56
  %v265 = vunpack.c.l.b16 %v57
  %v266 = vunpack.c.l.b16 %v58
  %v267 = vunpack.c.l.b16 %v59
  %v268 = vunpack.c.l.b16 %v60
  %v269 = vunpack.c.l.b16 %v61
  %v270 = vunpack.c.l.b16 %v62
  %v271 = vunpack.c.l.b16 %v63
  %v272 = vunpack.c.l.b16 %v64
  %v273 = vunpack.c.l.b16 %v65
  %v274 = vunpack.c.l.b16 %v66
  %v275 = vunpack.c.l.b16 %v67
  %v276 = vunpack.c.l.b16 %v68
  %v277 = vunpack.c.l.b16 %v69
  %v278 = vunpack.c.l.b16 %v70
  %v279 = vunpack.c.l.b16 %v71
  %v280 = vunpack.c.l.b16 %v72
  %v281 = vunpack.c.l.b16 %v73
  %v282 = vunpack.c.l.b16 %v74
  %v283 = vunpack.c.l.b16 %v75
  %v284 = vunpack.c.l.b16 %v76
  %v285 = vunpack.c.l.b16 %v77
  %v286 = vunpack.c.l.b16 %v78
  %v287 = vunpack.c.l.b16 %v79
  %v288 = vunpack.c.l.b16 %v80
  %v289 = vunpack.c.l.b16 %v81
  %v290 = vunpack.c.l.b16 %v82
  %v291 = vunpack.c.l.b16 %v83
  %v292 = vunpack.c.l.b16 %v84
  %v293 = vunpack.c.l.b16 %v85
  %v294 = vunpack.c.l.b16 %v86
  %v295 = vunpack.c.l.b16 %v87
  %v296 = vunpack.c.l.b16 %v88
  %v297 = vunpack.c.l.b16 %v89
  %v298 = vunpack.c.l.b16 %v90
  %v299 = vunpack.c.l.b16 %v91
  %v300 = vpack.c.b16 %v237, %v236
  %v301 = vpack.c.b16 %v239, %v238
  %v302 = vpack.c.b16 %v241, %v240
  %v303 = vpack.c.b16 %v243, %v242
  %v304 = vpack.c.b16 %v245, %v244
  %v305 = vpack.c.b16 %v247, %v246
  %v306 = vpack.c.b16 %v249, %v248
  %v307 = vpack.c.b16 %v251, %v250
  %v308 = vpack.c.b16 %v253, %v252
  %v309 = vpack.c.b16 %v255, %v254
  %v310 = vpack.c.b16 %v257, %v256
  %v311 = vpack.c.b16 %v259, %v258
  %v312 = vpack.c.b16 %v261, %v260
  %v313 = vpack.c.b16 %v263, %v262
  %v314 = vpack.c.b16 %v265, %v264
  %v315 = vpack.c.b16 %v267, %v266
  %v316 = vpack.c.b16 %v269, %v268
  %v317 = vpack.c.b16 %v271, %v270
  %v318 = vpack.c.b16 %v273, %v272
  %v319 = vpack.c.b16 %v275, %v274
  %v320 = vpack.c.b16 %v277, %v276
  %v321 = vpack.c.b16 %v279, %v278
  %v322 = vpack.c.b16 %v281, %v280
  %v323 = vpack.c.b16 %v283, %v282
  %v324 = vpack.c.b16 %v285, %v284
  %v325 = vpack.c.b16 %v287, %v286
  %v326 = vpack.c.b16 %v289, %v288
  %v327 = vpack.c.b16 %v291, %v290
  %v328 = vpack.c.b16 %v293, %v292
  %v329 = vpack.c.b16 %v295, %v294
  %v330 = vpack.c.b16 %v297, %v296
  %v331 = vpack.c.b16 %v299, %v298
  %364 = vmatprep.subr.bf16.mxu0 0
  %365 = vmatpush1.bf16.msra.mxu0 %v307
  %366 = vmatprep.subr.bf16.mxu0 0
  %367 = vmatpush1.bf16.msra.mxu0 %v306
  %368 = vmatprep.subr.bf16.mxu0 0
  %369 = vmatpush1.bf16.msra.mxu0 %v305
  %370 = vmatprep.subr.bf16.mxu0 0
  %371 = vmatpush1.bf16.msra.mxu0 %v304
  %372 = vmatprep.subr.bf16.mxu0 0
  %373 = vmatpush1.bf16.msra.mxu0 %v303
  %374 = vmatprep.subr.bf16.mxu0 0
  %375 = vmatpush1.bf16.msra.mxu0 %v302
  %376 = vmatprep.subr.bf16.mxu0 0
  %377 = vmatpush1.bf16.msra.mxu0 %v301
  %378 = vmatprep.subr.bf16.mxu0 0
  %379 = vmatpush1.bf16.msra.mxu0 %v300
  %380 = vmatprep.subr.bf16.mxu0 0
  %381 = vmatpush2.bf16.msra.mxu0 %v315
  %382 = vmatprep.subr.bf16.mxu0 0
  %383 = vmatpush2.bf16.msra.mxu0 %v314
  %384 = vmatprep.subr.bf16.mxu0 0
  %385 = vmatpush2.bf16.msra.mxu0 %v313
  %386 = vmatprep.subr.bf16.mxu0 0
  %387 = vmatpush2.bf16.msra.mxu0 %v312
  %388 = vmatprep.subr.bf16.mxu0 0
  %389 = vmatpush2.bf16.msra.mxu0 %v311
  %390 = vmatprep.subr.bf16.mxu0 0
  %391 = vmatpush2.bf16.msra.mxu0 %v310
  %392 = vmatprep.subr.bf16.mxu0 0
  %393 = vmatpush2.bf16.msra.mxu0 %v309
  %394 = vmatprep.subr.bf16.mxu0 0
  %395 = vmatpush2.bf16.msra.mxu0 %v308
  %396 = vmatprep.mubr.bf16.mxu0 %v141
  %397 = vmatmul.mubr.bf16.gmra.mxu0 %v140
  %v398 = vpop.f32.mrf.mxu0
  %v399 = vadd.f32 0.0, %v398
  %v400 = vpop.f32.mrf.mxu0
  %v401 = vpop.f32.mrf.mxu0
  %v402 = vadd.f32 0.0, %v401
  %v403 = vpop.f32.mrf.mxu0
  %404 = vmatprep.mubr.bf16.mxu0 %v145
  %405 = vmatmul.mubr.bf16.gmra.mxu0 %v144
  %v406 = vpop.f32.mrf.mxu0
  %v407 = vadd.f32 0.0, %v406
  %v408 = vpop.f32.mrf.mxu0
  %v409 = vpop.f32.mrf.mxu0
  %v410 = vadd.f32 0.0, %v409
  %v411 = vpop.f32.mrf.mxu0
  %412 = vmatprep.mubr.bf16.mxu0 %v149
  %413 = vmatmul.mubr.bf16.gmra.mxu0 %v148
  %v414 = vpop.f32.mrf.mxu0
  %v415 = vadd.f32 0.0, %v414
  %v416 = vpop.f32.mrf.mxu0
  %v417 = vpop.f32.mrf.mxu0
  %v418 = vadd.f32 0.0, %v417
  %v419 = vpop.f32.mrf.mxu0
  %420 = vmatprep.mubr.bf16.mxu0 %v153
  %421 = vmatmul.mubr.bf16.gmra.mxu0 %v152
  %v422 = vpop.f32.mrf.mxu0
  %v423 = vadd.f32 0.0, %v422
  %v424 = vpop.f32.mrf.mxu0
  %v425 = vpop.f32.mrf.mxu0
  %v426 = vadd.f32 0.0, %v425
  %v427 = vpop.f32.mrf.mxu0
  %428 = vdwg.mxu0
  %429 = vmatprep.subr.bf16.mxu0 0
  %430 = vmatpush1.bf16.msra.mxu0 %v323
  %431 = vmatprep.subr.bf16.mxu0 0
  %432 = vmatpush1.bf16.msra.mxu0 %v322
  %433 = vmatprep.subr.bf16.mxu0 0
  %434 = vmatpush1.bf16.msra.mxu0 %v321
  %435 = vmatprep.subr.bf16.mxu0 0
  %436 = vmatpush1.bf16.msra.mxu0 %v320
  %437 = vmatprep.subr.bf16.mxu0 0
  %438 = vmatpush1.bf16.msra.mxu0 %v319
  %439 = vmatprep.subr.bf16.mxu0 0
  %440 = vmatpush1.bf16.msra.mxu0 %v318
  %441 = vmatprep.subr.bf16.mxu0 0
  %442 = vmatpush1.bf16.msra.mxu0 %v317
  %443 = vmatprep.subr.bf16.mxu0 0
  %444 = vmatpush1.bf16.msra.mxu0 %v316
  %445 = vmatprep.subr.bf16.mxu0 0
  %446 = vmatpush2.bf16.msra.mxu0 %v331
  %447 = vmatprep.subr.bf16.mxu0 0
  %448 = vmatpush2.bf16.msra.mxu0 %v330
  %449 = vmatprep.subr.bf16.mxu0 0
  %450 = vmatpush2.bf16.msra.mxu0 %v329
  %451 = vmatprep.subr.bf16.mxu0 0
  %452 = vmatpush2.bf16.msra.mxu0 %v328
  %453 = vmatprep.subr.bf16.mxu0 0
  %454 = vmatpush2.bf16.msra.mxu0 %v327
  %455 = vmatprep.subr.bf16.mxu0 0
  %456 = vmatpush2.bf16.msra.mxu0 %v326
  %457 = vmatprep.subr.bf16.mxu0 0
  %458 = vmatpush2.bf16.msra.mxu0 %v325
  %459 = vmatprep.subr.bf16.mxu0 0
  %460 = vmatpush2.bf16.msra.mxu0 %v324
  %461 = vmatprep.mubr.bf16.mxu0 %v143
  %462 = vmatmul.mubr.bf16.gmra.mxu0 %v142
  %v463 = vpop.f32.mrf.mxu0
  %v464 = vadd.f32 %v399, %v463
  %v465 = vpop.f32.mrf.mxu0
  %v466 = vpop.f32.mrf.mxu0
  %v467 = vadd.f32 %v402, %v466
  %v468 = vpop.f32.mrf.mxu0
  %469 = vmatprep.mubr.bf16.mxu0 %v147
  %470 = vmatmul.mubr.bf16.gmra.mxu0 %v146
  %v471 = vpop.f32.mrf.mxu0
  %v472 = vadd.f32 %v407, %v471
  %v473 = vpop.f32.mrf.mxu0
  %v474 = vpop.f32.mrf.mxu0
  %v475 = vadd.f32 %v410, %v474
  %v476 = vpop.f32.mrf.mxu0
  %477 = vmatprep.mubr.bf16.mxu0 %v151
  %478 = vmatmul.mubr.bf16.gmra.mxu0 %v150
  %v479 = vpop.f32.mrf.mxu0
  %v480 = vadd.f32 %v415, %v479
  %v481 = vpop.f32.mrf.mxu0
  %v482 = vpop.f32.mrf.mxu0
  %v483 = vadd.f32 %v418, %v482
  %v484 = vpop.f32.mrf.mxu0
  %485 = vmatprep.mubr.bf16.mxu0 %v155
  %486 = vmatmul.mubr.bf16.gmra.mxu0 %v154
  %v487 = vpop.f32.mrf.mxu0
  %v488 = vadd.f32 %v423, %v487
  %v489 = vpop.f32.mrf.mxu0
  %v490 = vpop.f32.mrf.mxu0
  %v491 = vadd.f32 %v426, %v490
  %v492 = vpop.f32.mrf.mxu0
  %493 = vdwg.mxu0
  %494 = vst [vmem:[%s2] sm:$0xff] %v464
  %495 = vst [vmem:[%s2 + $0x8] sm:$0xff] %v467
  %496 = vst [vmem:[%s2 + $0x10] sm:$0xff] %v472
  %497 = vst [vmem:[%s2 + $0x18] sm:$0xff] %v475
  %498 = vst [vmem:[%s2 + $0x20] sm:$0xff] %v480
  %499 = vst [vmem:[%s2 + $0x28] sm:$0xff] %v483
  %500 = vst [vmem:[%s2 + $0x30] sm:$0xff] %v488
  %501 = vst [vmem:[%s2 + $0x38] sm:$0xff] %v491
  // Predicated region
  $region10: #{encoder_forward.9} parent=0 // pred_check
    _
  $region11: #{encoder_forward.9} parent=0 // pred_check_branch
    %503 = sbr.rel (0) target = $region13
  $region12: #{encoder_forward.9} parent=0 // pred_region
    _
  $region13: #{encoder_forward.9} parent=0 // pred_fallthru
    _
  // Predicated region
  $region14: #{encoder_forward.9} parent=0 // pred_check
    _
  $region15: #{encoder_forward.9} parent=0 // pred_check_branch
    %505 = sbr.rel (0) target = $region17
  $region16: #{encoder_forward.9} parent=0 // pred_region
    _
  $region17: #{encoder_forward.9} parent=0 // pred_fallthru
    _

// kernel: encoder_forward.10
$region0: #{encoder_forward.10}
  #allocation0 [shape = 'u32[]', space=smem, size = 0x4, offset = 0x4, fixed_abs, tag = 'smem constant byte address 0x4 - core index']
  #allocation1 [shape = 'u32[144,128]{1,0:T(1,128)}', space=vmem, size = 0x12000, scoped, tag = 'internal scratch']
  %s0 = inlined_call_operand.vmem [shape: bf16[1024,128], index: 0, kind: input, shape index: {}]
  %s1 = inlined_call_operand.vmem [shape: bf16[64,1024], index: 1, kind: input, shape index: {}]
  %s2 = inlined_call_operand.vmem [shape: f32[64,128], index: 2, kind: output, shape index: {}]
  %s3 = sld [smem:[#allocation0]]
  $region18: #{encoder_forward.10} parent=0
    _
  %s5 = ssub.s32 1, %s3
  %s6 = scalar_select 0, %s5, %s3
  // Predicated region
  $region2: #{encoder_forward.10} parent=0 // pred_check
    _
  $region3: #{encoder_forward.10} parent=0 // pred_check_branch
    %8 = sbr.rel (0) target = $region5
  $region4: #{encoder_forward.10} parent=0 // pred_region
    _
  $region5: #{encoder_forward.10} parent=0 // pred_fallthru
    _
  // Predicated region
  $region6: #{encoder_forward.10} parent=0 // pred_check
    _
  $region7: #{encoder_forward.10} parent=0 // pred_check_branch
    %10 = sbr.rel (0) target = $region9
  $region8: #{encoder_forward.10} parent=0 // pred_region
    _
  $region9: #{encoder_forward.10} parent=0 // pred_fallthru
    _
  %v12 = vld [vmem:[%s1] sm:$0xff]
  %v13 = vld [vmem:[%s1 + $0x8] sm:$0xff]
  %v14 = vld [vmem:[%s1 + $0x10] sm:$0xff]
  %v15 = vld [vmem:[%s1 + $0x18] sm:$0xff]
  %v16 = vld [vmem:[%s1 + $0x20] sm:$0xff]
  %v17 = vld [vmem:[%s1 + $0x28] sm:$0xff]
  %v18 = vld [vmem:[%s1 + $0x30] sm:$0xff]
  %v19 = vld [vmem:[%s1 + $0x38] sm:$0xff]
  %v20 = vld [vmem:[%s1 + $0x40] sm:$0xff]
  %v21 = vld [vmem:[%s1 + $0x48] sm:$0xff]
  %v22 = vld [vmem:[%s1 + $0x50] sm:$0xff]
  %v23 = vld [vmem:[%s1 + $0x58] sm:$0xff]
  %v24 = vld [vmem:[%s1 + $0x60] sm:$0xff]
  %v25 = vld [vmem:[%s1 + $0x68] sm:$0xff]
  %v26 = vld [vmem:[%s1 + $0x70] sm:$0xff]
  %v27 = vld [vmem:[%s1 + $0x78] sm:$0xff]
  %v28 = vld [vmem:[%s1 + $0x80] sm:$0xff]
  %v29 = vld [vmem:[%s1 + $0x88] sm:$0xff]
  %v30 = vld [vmem:[%s1 + $0x90] sm:$0xff]
  %v31 = vld [vmem:[%s1 + $0x98] sm:$0xff]
  %v32 = vld [vmem:[%s1 + $0xa0] sm:$0xff]
  %v33 = vld [vmem:[%s1 + $0xa8] sm:$0xff]
  %v34 = vld [vmem:[%s1 + $0xb0] sm:$0xff]
  %v35 = vld [vmem:[%s1 + $0xb8] sm:$0xff]
  %v36 = vld [vmem:[%s1 + $0xc0] sm:$0xff]
  %v37 = vld [vmem:[%s1 + $0xc8] sm:$0xff]
  %v38 = vld [vmem:[%s1 + $0xd0] sm:$0xff]
  %v39 = vld [vmem:[%s1 + $0xd8] sm:$0xff]
  %v40 = vld [vmem:[%s1 + $0xe0] sm:$0xff]
  %v41 = vld [vmem:[%s1 + $0xe8] sm:$0xff]
  %v42 = vld [vmem:[%s1 + $0xf0] sm:$0xff]
  %v43 = vld [vmem:[%s1 + $0xf8] sm:$0xff]
  %v44 = vld [vmem:[%s0] sm:$0xf]
  %v45 = vld [vmem:[%s0 + $0x4] sm:$0xf]
  %v46 = vld [vmem:[%s0 + $0x8] sm:$0xf]
  %v47 = vld [vmem:[%s0 + $0xc] sm:$0xf]
  %v48 = vld [vmem:[%s0 + $0x10] sm:$0xf]
  %v49 = vld [vmem:[%s0 + $0x14] sm:$0xf]
  %v50 = vld [vmem:[%s0 + $0x18] sm:$0xf]
  %v51 = vld [vmem:[%s0 + $0x1c] sm:$0xf]
  %v52 = vld [vmem:[%s0 + $0x20] sm:$0xf]
  %v53 = vld [vmem:[%s0 + $0x24] sm:$0xf]
  %v54 = vld [vmem:[%s0 + $0x28] sm:$0xf]
  %v55 = vld [vmem:[%s0 + $0x2c] sm:$0xf]
  %v56 = vld [vmem:[%s0 + $0x30] sm:$0xf]
  %v57 = vld [vmem:[%s0 + $0x34] sm:$0xf]
  %v58 = vld [vmem:[%s0 + $0x38] sm:$0xf]
  %v59 = vld [vmem:[%s0 + $0x3c] sm:$0xf]
  %v60 = vld [vmem:[%s0 + $0x40] sm:$0xf]
  %v61 = vld [vmem:[%s0 + $0x44] sm:$0xf]
  %v62 = vld [vmem:[%s0 + $0x48] sm:$0xf]
  %v63 = vld [vmem:[%s0 + $0x4c] sm:$0xf]
  %v64 = vld [vmem:[%s0 + $0x50] sm:$0xf]
  %v65 = vld [vmem:[%s0 + $0x54] sm:$0xf]
  %v66 = vld [vmem:[%s0 + $0x58] sm:$0xf]
  %v67 = vld [vmem:[%s0 + $0x5c] sm:$0xf]
  %v68 = vld [vmem:[%s0 + $0x60] sm:$0xf]
  %v69 = vld [vmem:[%s0 + $0x64] sm:$0xf]
  %v70 = vld [vmem:[%s0 + $0x68] sm:$0xf]
  %v71 = vld [vmem:[%s0 + $0x6c] sm:$0xf]
  %v72 = vld [vmem:[%s0 + $0x70] sm:$0xf]
  %v73 = vld [vmem:[%s0 + $0x74] sm:$0xf]
  %v74 = vld [vmem:[%s0 + $0x78] sm:$0xf]
  %v75 = vld [vmem:[%s0 + $0x7c] sm:$0xf]
  %v76 = vld [vmem:[%s0 + $0x80] sm:$0xf]
  %v77 = vld [vmem:[%s0 + $0x84] sm:$0xf]
  %v78 = vld [vmem:[%s0 + $0x88] sm:$0xf]
  %v79 = vld [vmem:[%s0 + $0x8c] sm:$0xf]
  %v80 = vld [vmem:[%s0 + $0x90] sm:$0xf]
  %v81 = vld [vmem:[%s0 + $0x94] sm:$0xf]
  %v82 = vld [vmem:[%s0 + $0x98] sm:$0xf]
  %v83 = vld [vmem:[%s0 + $0x9c] sm:$0xf]
  %v84 = vld [vmem:[%s0 + $0xa0] sm:$0xf]
  %v85 = vld [vmem:[%s0 + $0xa4] sm:$0xf]
  %v86 = vld [vmem:[%s0 + $0xa8] sm:$0xf]
  %v87 = vld [vmem:[%s0 + $0xac] sm:$0xf]
  %v88 = vld [vmem:[%s0 + $0xb0] sm:$0xf]
  %v89 = vld [vmem:[%s0 + $0xb4] sm:$0xf]
  %v90 = vld [vmem:[%s0 + $0xb8] sm:$0xf]
  %v91 = vld [vmem:[%s0 + $0xbc] sm:$0xf]
  %v92 = vld [vmem:[%s0 + $0xc0] sm:$0xf]
  %v93 = vld [vmem:[%s0 + $0xc4] sm:$0xf]
  %v94 = vld [vmem:[%s0 + $0xc8] sm:$0xf]
  %v95 = vld [vmem:[%s0 + $0xcc] sm:$0xf]
  %v96 = vld [vmem:[%s0 + $0xd0] sm:$0xf]
  %v97 = vld [vmem:[%s0 + $0xd4] sm:$0xf]
  %v98 = vld [vmem:[%s0 + $0xd8] sm:$0xf]
  %v99 = vld [vmem:[%s0 + $0xdc] sm:$0xf]
  %v100 = vld [vmem:[%s0 + $0xe0] sm:$0xf]
  %v101 = vld [vmem:[%s0 + $0xe4] sm:$0xf]
  %v102 = vld [vmem:[%s0 + $0xe8] sm:$0xf]
  %v103 = vld [vmem:[%s0 + $0xec] sm:$0xf]
  %v104 = vld [vmem:[%s0 + $0xf0] sm:$0xf]
  %v105 = vld [vmem:[%s0 + $0xf4] sm:$0xf]
  %v106 = vld [vmem:[%s0 + $0xf8] sm:$0xf]
  %v107 = vld [vmem:[%s0 + $0xfc] sm:$0xf]
  %v108 = vld [vmem:[%s0 + $0x100] sm:$0xf]
  %v109 = vld [vmem:[%s0 + $0x104] sm:$0xf]
  %v110 = vld [vmem:[%s0 + $0x108] sm:$0xf]
  %v111 = vld [vmem:[%s0 + $0x10c] sm:$0xf]
  %v112 = vld [vmem:[%s0 + $0x110] sm:$0xf]
  %v113 = vld [vmem:[%s0 + $0x114] sm:$0xf]
  %v114 = vld [vmem:[%s0 + $0x118] sm:$0xf]
  %v115 = vld [vmem:[%s0 + $0x11c] sm:$0xf]
  %v116 = vld [vmem:[%s0 + $0x120] sm:$0xf]
  %v117 = vld [vmem:[%s0 + $0x124] sm:$0xf]
  %v118 = vld [vmem:[%s0 + $0x128] sm:$0xf]
  %v119 = vld [vmem:[%s0 + $0x12c] sm:$0xf]
  %v120 = vld [vmem:[%s0 + $0x130] sm:$0xf]
  %v121 = vld [vmem:[%s0 + $0x134] sm:$0xf]
  %v122 = vld [vmem:[%s0 + $0x138] sm:$0xf]
  %v123 = vld [vmem:[%s0 + $0x13c] sm:$0xf]
  %v124 = vld [vmem:[%s0 + $0x140] sm:$0xf]
  %v125 = vld [vmem:[%s0 + $0x144] sm:$0xf]
  %v126 = vld [vmem:[%s0 + $0x148] sm:$0xf]
  %v127 = vld [vmem:[%s0 + $0x14c] sm:$0xf]
  %v128 = vld [vmem:[%s0 + $0x150] sm:$0xf]
  %v129 = vld [vmem:[%s0 + $0x154] sm:$0xf]
  %v130 = vld [vmem:[%s0 + $0x158] sm:$0xf]
  %v131 = vld [vmem:[%s0 + $0x15c] sm:$0xf]
  %v132 = vld [vmem:[%s0 + $0x160] sm:$0xf]
  %v133 = vld [vmem:[%s0 + $0x164] sm:$0xf]
  %v134 = vld [vmem:[%s0 + $0x168] sm:$0xf]
  %v135 = vld [vmem:[%s0 + $0x16c] sm:$0xf]
  %v136 = vld [vmem:[%s0 + $0x170] sm:$0xf]
  %v137 = vld [vmem:[%s0 + $0x174] sm:$0xf]
  %v138 = vld [vmem:[%s0 + $0x178] sm:$0xf]
  %v139 = vld [vmem:[%s0 + $0x17c] sm:$0xf]
  %v140 = vld [vmem:[%s0 + $0x180] sm:$0xf]
  %v141 = vld [vmem:[%s0 + $0x184] sm:$0xf]
  %v142 = vld [vmem:[%s0 + $0x188] sm:$0xf]
  %v143 = vld [vmem:[%s0 + $0x18c] sm:$0xf]
  %v144 = vld [vmem:[%s0 + $0x190] sm:$0xf]
  %v145 = vld [vmem:[%s0 + $0x194] sm:$0xf]
  %v146 = vld [vmem:[%s0 + $0x198] sm:$0xf]
  %v147 = vld [vmem:[%s0 + $0x19c] sm:$0xf]
  %v148 = vld [vmem:[%s0 + $0x1a0] sm:$0xf]
  %v149 = vld [vmem:[%s0 + $0x1a4] sm:$0xf]
  %v150 = vld [vmem:[%s0 + $0x1a8] sm:$0xf]
  %v151 = vld [vmem:[%s0 + $0x1ac] sm:$0xf]
  %v152 = vld [vmem:[%s0 + $0x1b0] sm:$0xf]
  %v153 = vld [vmem:[%s0 + $0x1b4] sm:$0xf]
  %v154 = vld [vmem:[%s0 + $0x1b8] sm:$0xf]
  %v155 = vld [vmem:[%s0 + $0x1bc] sm:$0xf]
  %v156 = vld [vmem:[%s0 + $0x1c0] sm:$0xf]
  %v157 = vld [vmem:[%s0 + $0x1c4] sm:$0xf]
  %v158 = vld [vmem:[%s0 + $0x1c8] sm:$0xf]
  %v159 = vld [vmem:[%s0 + $0x1cc] sm:$0xf]
  %v160 = vld [vmem:[%s0 + $0x1d0] sm:$0xf]
  %v161 = vld [vmem:[%s0 + $0x1d4] sm:$0xf]
  %v162 = vld [vmem:[%s0 + $0x1d8] sm:$0xf]
  %v163 = vld [vmem:[%s0 + $0x1dc] sm:$0xf]
  %v164 = vld [vmem:[%s0 + $0x1e0] sm:$0xf]
  %v165 = vld [vmem:[%s0 + $0x1e4] sm:$0xf]
  %v166 = vld [vmem:[%s0 + $0x1e8] sm:$0xf]
  %v167 = vld [vmem:[%s0 + $0x1ec] sm:$0xf]
  %v168 = vld [vmem:[%s0 + $0x1f0] sm:$0xf]
  %v169 = vld [vmem:[%s0 + $0x1f4] sm:$0xf]
  %v170 = vld [vmem:[%s0 + $0x1f8] sm:$0xf]
  %v171 = vld [vmem:[%s0 + $0x1fc] sm:$0xf]
  %v204 = vunpack.c.l.b16 %v12
  %v205 = vunpack.c.h.b16 %v12
  %v206 = vunpack.c.l.b16 %v13
  %v207 = vunpack.c.h.b16 %v13
  %v208 = vunpack.c.l.b16 %v14
  %v209 = vunpack.c.h.b16 %v14
  %v210 = vunpack.c.l.b16 %v15
  %v211 = vunpack.c.h.b16 %v15
  %v212 = vunpack.c.l.b16 %v16
  %v213 = vunpack.c.h.b16 %v16
  %v214 = vunpack.c.l.b16 %v17
  %v215 = vunpack.c.h.b16 %v17
  %v216 = vunpack.c.l.b16 %v18
  %v217 = vunpack.c.h.b16 %v18
  %v218 = vunpack.c.l.b16 %v19
  %v219 = vunpack.c.h.b16 %v19
  %v220 = vunpack.c.l.b16 %v20
  %v221 = vunpack.c.h.b16 %v20
  %v222 = vunpack.c.l.b16 %v21
  %v223 = vunpack.c.h.b16 %v21
  %v224 = vunpack.c.l.b16 %v22
  %v225 = vunpack.c.h.b16 %v22
  %v226 = vunpack.c.l.b16 %v23
  %v227 = vunpack.c.h.b16 %v23
  %v228 = vunpack.c.l.b16 %v24
  %v229 = vunpack.c.h.b16 %v24
  %v230 = vunpack.c.l.b16 %v25
  %v231 = vunpack.c.h.b16 %v25
  %v232 = vunpack.c.l.b16 %v26
  %v233 = vunpack.c.h.b16 %v26
  %v234 = vunpack.c.l.b16 %v27
  %v235 = vunpack.c.h.b16 %v27
  %v236 = vunpack.c.l.b16 %v28
  %v237 = vunpack.c.h.b16 %v28
  %v238 = vunpack.c.l.b16 %v29
  %v239 = vunpack.c.h.b16 %v29
  %v240 = vunpack.c.l.b16 %v30
  %v241 = vunpack.c.h.b16 %v30
  %v242 = vunpack.c.l.b16 %v31
  %v243 = vunpack.c.h.b16 %v31
  %v244 = vunpack.c.l.b16 %v32
  %v245 = vunpack.c.h.b16 %v32
  %v246 = vunpack.c.l.b16 %v33
  %v247 = vunpack.c.h.b16 %v33
  %v248 = vunpack.c.l.b16 %v34
  %v249 = vunpack.c.h.b16 %v34
  %v250 = vunpack.c.l.b16 %v35
  %v251 = vunpack.c.h.b16 %v35
  %v252 = vunpack.c.l.b16 %v36
  %v253 = vunpack.c.h.b16 %v36
  %v254 = vunpack.c.l.b16 %v37
  %v255 = vunpack.c.h.b16 %v37
  %v256 = vunpack.c.l.b16 %v38
  %v257 = vunpack.c.h.b16 %v38
  %v258 = vunpack.c.l.b16 %v39
  %v259 = vunpack.c.h.b16 %v39
  %v260 = vunpack.c.l.b16 %v40
  %v261 = vunpack.c.h.b16 %v40
  %v262 = vunpack.c.l.b16 %v41
  %v263 = vunpack.c.h.b16 %v41
  %v264 = vunpack.c.l.b16 %v42
  %v265 = vunpack.c.h.b16 %v42
  %v266 = vunpack.c.l.b16 %v43
  %v267 = vunpack.c.h.b16 %v43
  %v268 = vpack.c.b16 %v212, %v204
  %v269 = vpack.c.b16 %v213, %v205
  %v270 = vpack.c.b16 %v214, %v206
  %v271 = vpack.c.b16 %v215, %v207
  %v272 = vpack.c.b16 %v216, %v208
  %v273 = vpack.c.b16 %v217, %v209
  %v274 = vpack.c.b16 %v218, %v210
  %v275 = vpack.c.b16 %v219, %v211
  %v276 = vpack.c.b16 %v228, %v220
  %v277 = vpack.c.b16 %v229, %v221
  %v278 = vpack.c.b16 %v230, %v222
  %v279 = vpack.c.b16 %v231, %v223
  %v280 = vpack.c.b16 %v232, %v224
  %v281 = vpack.c.b16 %v233, %v225
  %v282 = vpack.c.b16 %v234, %v226
  %v283 = vpack.c.b16 %v235, %v227
  %v284 = vpack.c.b16 %v244, %v236
  %v285 = vpack.c.b16 %v245, %v237
  %v286 = vpack.c.b16 %v246, %v238
  %v287 = vpack.c.b16 %v247, %v239
  %v288 = vpack.c.b16 %v248, %v240
  %v289 = vpack.c.b16 %v249, %v241
  %v290 = vpack.c.b16 %v250, %v242
  %v291 = vpack.c.b16 %v251, %v243
  %v292 = vpack.c.b16 %v260, %v252
  %v293 = vpack.c.b16 %v261, %v253
  %v294 = vpack.c.b16 %v262, %v254
  %v295 = vpack.c.b16 %v263, %v255
  %v296 = vpack.c.b16 %v264, %v256
  %v297 = vpack.c.b16 %v265, %v257
  %v298 = vpack.c.b16 %v266, %v258
  %v299 = vpack.c.b16 %v267, %v259
  %v460 = vunpack.c.l.b16 %v44
  %v461 = vunpack.c.l.b16 %v45
  %v462 = vunpack.c.l.b16 %v46
  %v463 = vunpack.c.l.b16 %v47
  %v464 = vunpack.c.l.b16 %v48
  %v465 = vunpack.c.l.b16 %v49
  %v466 = vunpack.c.l.b16 %v50
  %v467 = vunpack.c.l.b16 %v51
  %v468 = vunpack.c.l.b16 %v52
  %v469 = vunpack.c.l.b16 %v53
  %v470 = vunpack.c.l.b16 %v54
  %v471 = vunpack.c.l.b16 %v55
  %v472 = vunpack.c.l.b16 %v56
  %v473 = vunpack.c.l.b16 %v57
  %v474 = vunpack.c.l.b16 %v58
  %v475 = vunpack.c.l.b16 %v59
  %v476 = vunpack.c.l.b16 %v60
  %v477 = vunpack.c.l.b16 %v61
  %v478 = vunpack.c.l.b16 %v62
  %v479 = vunpack.c.l.b16 %v63
  %v480 = vunpack.c.l.b16 %v64
  %v481 = vunpack.c.l.b16 %v65
  %v482 = vunpack.c.l.b16 %v66
  %v483 = vunpack.c.l.b16 %v67
  %v484 = vunpack.c.l.b16 %v68
  %v485 = vunpack.c.l.b16 %v69
  %v486 = vunpack.c.l.b16 %v70
  %v487 = vunpack.c.l.b16 %v71
  %v488 = vunpack.c.l.b16 %v72
  %v489 = vunpack.c.l.b16 %v73
  %v490 = vunpack.c.l.b16 %v74
  %v491 = vunpack.c.l.b16 %v75
  %v492 = vunpack.c.l.b16 %v76
  %v493 = vunpack.c.l.b16 %v77
  %v494 = vunpack.c.l.b16 %v78
  %v495 = vunpack.c.l.b16 %v79
  %v496 = vunpack.c.l.b16 %v80
  %v497 = vunpack.c.l.b16 %v81
  %v498 = vunpack.c.l.b16 %v82
  %v499 = vunpack.c.l.b16 %v83
  %v500 = vunpack.c.l.b16 %v84
  %v501 = vunpack.c.l.b16 %v85
  %v502 = vunpack.c.l.b16 %v86
  %v503 = vunpack.c.l.b16 %v87
  %v504 = vunpack.c.l.b16 %v88
  %v505 = vunpack.c.l.b16 %v89
  %v506 = vunpack.c.l.b16 %v90
  %v507 = vunpack.c.l.b16 %v91
  %v508 = vunpack.c.l.b16 %v92
  %v509 = vunpack.c.l.b16 %v93
  %v510 = vunpack.c.l.b16 %v94
  %v511 = vunpack.c.l.b16 %v95
  %v512 = vunpack.c.l.b16 %v96
  %v513 = vunpack.c.l.b16 %v97
  %v514 = vunpack.c.l.b16 %v98
  %v515 = vunpack.c.l.b16 %v99
  %v516 = vunpack.c.l.b16 %v100
  %v517 = vunpack.c.l.b16 %v101
  %v518 = vunpack.c.l.b16 %v102
  %v519 = vunpack.c.l.b16 %v103
  %v520 = vunpack.c.l.b16 %v104
  %v521 = vunpack.c.l.b16 %v105
  %v522 = vunpack.c.l.b16 %v106
  %v523 = vunpack.c.l.b16 %v107
  %v524 = vunpack.c.l.b16 %v108
  %v525 = vunpack.c.l.b16 %v109
  %v526 = vunpack.c.l.b16 %v110
  %v527 = vunpack.c.l.b16 %v111
  %v528 = vunpack.c.l.b16 %v112
  %v529 = vunpack.c.l.b16 %v113
  %v530 = vunpack.c.l.b16 %v114
  %v531 = vunpack.c.l.b16 %v115
  %v532 = vunpack.c.l.b16 %v116
  %v533 = vunpack.c.l.b16 %v117
  %v534 = vunpack.c.l.b16 %v118
  %v535 = vunpack.c.l.b16 %v119
  %v536 = vunpack.c.l.b16 %v120
  %v537 = vunpack.c.l.b16 %v121
  %v538 = vunpack.c.l.b16 %v122
  %v539 = vunpack.c.l.b16 %v123
  %v540 = vunpack.c.l.b16 %v124
  %v541 = vunpack.c.l.b16 %v125
  %v542 = vunpack.c.l.b16 %v126
  %v543 = vunpack.c.l.b16 %v127
  %v544 = vunpack.c.l.b16 %v128
  %v545 = vunpack.c.l.b16 %v129
  %v546 = vunpack.c.l.b16 %v130
  %v547 = vunpack.c.l.b16 %v131
  %v548 = vunpack.c.l.b16 %v132
  %v549 = vunpack.c.l.b16 %v133
  %v550 = vunpack.c.l.b16 %v134
  %v551 = vunpack.c.l.b16 %v135
  %v552 = vunpack.c.l.b16 %v136
  %v553 = vunpack.c.l.b16 %v137
  %v554 = vunpack.c.l.b16 %v138
  %v555 = vunpack.c.l.b16 %v139
  %v556 = vunpack.c.l.b16 %v140
  %v557 = vunpack.c.l.b16 %v141
  %v558 = vunpack.c.l.b16 %v142
  %v559 = vunpack.c.l.b16 %v143
  %v560 = vunpack.c.l.b16 %v144
  %v561 = vunpack.c.l.b16 %v145
  %v562 = vunpack.c.l.b16 %v146
  %v563 = vunpack.c.l.b16 %v147
  %v564 = vunpack.c.l.b16 %v148
  %v565 = vunpack.c.l.b16 %v149
  %v566 = vunpack.c.l.b16 %v150
  %v567 = vunpack.c.l.b16 %v151
  %v568 = vunpack.c.l.b16 %v152
  %v569 = vunpack.c.l.b16 %v153
  %v570 = vunpack.c.l.b16 %v154
  %v571 = vunpack.c.l.b16 %v155
  %v572 = vunpack.c.l.b16 %v156
  %v573 = vunpack.c.l.b16 %v157
  %v574 = vunpack.c.l.b16 %v158
  %v575 = vunpack.c.l.b16 %v159
  %v576 = vunpack.c.l.b16 %v160
  %v577 = vunpack.c.l.b16 %v161
  %v578 = vunpack.c.l.b16 %v162
  %v579 = vunpack.c.l.b16 %v163
  %v580 = vunpack.c.l.b16 %v164
  %v581 = vunpack.c.l.b16 %v165
  %v582 = vunpack.c.l.b16 %v166
  %v583 = vunpack.c.l.b16 %v167
  %v584 = vunpack.c.l.b16 %v168
  %v585 = vunpack.c.l.b16 %v169
  %v586 = vunpack.c.l.b16 %v170
  %v587 = vunpack.c.l.b16 %v171
  %v588 = vpack.c.b16 %v461, %v460
  %v589 = vpack.c.b16 %v463, %v462
  %v590 = vpack.c.b16 %v465, %v464
  %v591 = vpack.c.b16 %v467, %v466
  %v592 = vpack.c.b16 %v469, %v468
  %v593 = vpack.c.b16 %v471, %v470
  %v594 = vpack.c.b16 %v473, %v472
  %v595 = vpack.c.b16 %v475, %v474
  %v596 = vpack.c.b16 %v477, %v476
  %v597 = vpack.c.b16 %v479, %v478
  %v598 = vpack.c.b16 %v481, %v480
  %v599 = vpack.c.b16 %v483, %v482
  %v600 = vpack.c.b16 %v485, %v484
  %v601 = vpack.c.b16 %v487, %v486
  %v602 = vpack.c.b16 %v489, %v488
  %v603 = vpack.c.b16 %v491, %v490
  %v604 = vpack.c.b16 %v493, %v492
  %v605 = vpack.c.b16 %v495, %v494
  %v606 = vpack.c.b16 %v497, %v496
  %v607 = vpack.c.b16 %v499, %v498
  %v608 = vpack.c.b16 %v501, %v500
  %v609 = vpack.c.b16 %v503, %v502
  %v610 = vpack.c.b16 %v505, %v504
  %v611 = vpack.c.b16 %v507, %v506
  %v612 = vpack.c.b16 %v509, %v508
  %v613 = vpack.c.b16 %v511, %v510
  %v614 = vpack.c.b16 %v513, %v512
  %v615 = vpack.c.b16 %v515, %v514
  %v616 = vpack.c.b16 %v517, %v516
  %v617 = vpack.c.b16 %v519, %v518
  %v618 = vpack.c.b16 %v521, %v520
  %v619 = vpack.c.b16 %v523, %v522
  %v620 = vpack.c.b16 %v525, %v524
  %v621 = vpack.c.b16 %v527, %v526
  %v622 = vpack.c.b16 %v529, %v528
  %v623 = vpack.c.b16 %v531, %v530
  %v624 = vpack.c.b16 %v533, %v532
  %v625 = vpack.c.b16 %v535, %v534
  %v626 = vpack.c.b16 %v537, %v536
  %v627 = vpack.c.b16 %v539, %v538
  %v628 = vpack.c.b16 %v541, %v540
  %v629 = vpack.c.b16 %v543, %v542
  %v630 = vpack.c.b16 %v545, %v544
  %v631 = vpack.c.b16 %v547, %v546
  %v632 = vpack.c.b16 %v549, %v548
  %v633 = vpack.c.b16 %v551, %v550
  %v634 = vpack.c.b16 %v553, %v552
  %v635 = vpack.c.b16 %v555, %v554
  %v636 = vpack.c.b16 %v557, %v556
  %v637 = vpack.c.b16 %v559, %v558
  %v638 = vpack.c.b16 %v561, %v560
  %v639 = vpack.c.b16 %v563, %v562
  %v640 = vpack.c.b16 %v565, %v564
  %v641 = vpack.c.b16 %v567, %v566
  %v642 = vpack.c.b16 %v569, %v568
  %v643 = vpack.c.b16 %v571, %v570
  %v644 = vpack.c.b16 %v573, %v572
  %v645 = vpack.c.b16 %v575, %v574
  %v646 = vpack.c.b16 %v577, %v576
  %v647 = vpack.c.b16 %v579, %v578
  %v648 = vpack.c.b16 %v581, %v580
  %v649 = vpack.c.b16 %v583, %v582
  %v650 = vpack.c.b16 %v585, %v584
  %v651 = vpack.c.b16 %v587, %v586
  %716 = vmatprep.subr.bf16.mxu0 0
  %717 = vmatpush1.bf16.msra.mxu0 %v595
  %718 = vmatprep.subr.bf16.mxu0 0
  %719 = vmatpush1.bf16.msra.mxu0 %v594
  %720 = vmatprep.subr.bf16.mxu0 0
  %721 = vmatpush1.bf16.msra.mxu0 %v593
  %722 = vmatprep.subr.bf16.mxu0 0
  %723 = vmatpush1.bf16.msra.mxu0 %v592
  %724 = vmatprep.subr.bf16.mxu0 0
  %725 = vmatpush1.bf16.msra.mxu0 %v591
  %726 = vmatprep.subr.bf16.mxu0 0
  %727 = vmatpush1.bf16.msra.mxu0 %v590
  %728 = vmatprep.subr.bf16.mxu0 0
  %729 = vmatpush1.bf16.msra.mxu0 %v589
  %730 = vmatprep.subr.bf16.mxu0 0
  %731 = vmatpush1.bf16.msra.mxu0 %v588
  %732 = vmatprep.subr.bf16.mxu0 0
  %733 = vmatpush2.bf16.msra.mxu0 %v603
  %734 = vmatprep.subr.bf16.mxu0 0
  %735 = vmatpush2.bf16.msra.mxu0 %v602
  %736 = vmatprep.subr.bf16.mxu0 0
  %737 = vmatpush2.bf16.msra.mxu0 %v601
  %738 = vmatprep.subr.bf16.mxu0 0
  %739 = vmatpush2.bf16.msra.mxu0 %v600
  %740 = vmatprep.subr.bf16.mxu0 0
  %741 = vmatpush2.bf16.msra.mxu0 %v599
  %742 = vmatprep.subr.bf16.mxu0 0
  %743 = vmatpush2.bf16.msra.mxu0 %v598
  %744 = vmatprep.subr.bf16.mxu0 0
  %745 = vmatpush2.bf16.msra.mxu0 %v597
  %746 = vmatprep.subr.bf16.mxu0 0
  %747 = vmatpush2.bf16.msra.mxu0 %v596
  %748 = vmatprep.mubr.bf16.mxu0 %v269
  %749 = vmatmul.mubr.bf16.gmra.mxu0 %v268
  %v750 = vpop.f32.mrf.mxu0
  %v751 = vadd.f32 0.0, %v750
  %v752 = vpop.f32.mrf.mxu0
  %v753 = vpop.f32.mrf.mxu0
  %v754 = vadd.f32 0.0, %v753
  %v755 = vpop.f32.mrf.mxu0
  %756 = vmatprep.mubr.bf16.mxu0 %v277
  %757 = vmatmul.mubr.bf16.gmra.mxu0 %v276
  %v758 = vpop.f32.mrf.mxu0
  %v759 = vadd.f32 0.0, %v758
  %v760 = vpop.f32.mrf.mxu0
  %v761 = vpop.f32.mrf.mxu0
  %v762 = vadd.f32 0.0, %v761
  %v763 = vpop.f32.mrf.mxu0
  %764 = vmatprep.mubr.bf16.mxu0 %v285
  %765 = vmatmul.mubr.bf16.gmra.mxu0 %v284
  %v766 = vpop.f32.mrf.mxu0
  %v767 = vadd.f32 0.0, %v766
  %v768 = vpop.f32.mrf.mxu0
  %v769 = vpop.f32.mrf.mxu0
  %v770 = vadd.f32 0.0, %v769
  %v771 = vpop.f32.mrf.mxu0
  %772 = vmatprep.mubr.bf16.mxu0 %v293
  %773 = vmatmul.mubr.bf16.gmra.mxu0 %v292
  %v774 = vpop.f32.mrf.mxu0
  %v775 = vadd.f32 0.0, %v774
  %v776 = vpop.f32.mrf.mxu0
  %v777 = vpop.f32.mrf.mxu0
  %v778 = vadd.f32 0.0, %v777
  %v779 = vpop.f32.mrf.mxu0
  %780 = vdwg.mxu0
  %781 = vmatprep.subr.bf16.mxu0 0
  %782 = vmatpush1.bf16.msra.mxu0 %v611
  %783 = vmatprep.subr.bf16.mxu0 0
  %784 = vmatpush1.bf16.msra.mxu0 %v610
  %785 = vmatprep.subr.bf16.mxu0 0
  %786 = vmatpush1.bf16.msra.mxu0 %v609
  %787 = vmatprep.subr.bf16.mxu0 0
  %788 = vmatpush1.bf16.msra.mxu0 %v608
  %789 = vmatprep.subr.bf16.mxu0 0
  %790 = vmatpush1.bf16.msra.mxu0 %v607
  %791 = vmatprep.subr.bf16.mxu0 0
  %792 = vmatpush1.bf16.msra.mxu0 %v606
  %793 = vmatprep.subr.bf16.mxu0 0
  %794 = vmatpush1.bf16.msra.mxu0 %v605
  %795 = vmatprep.subr.bf16.mxu0 0
  %796 = vmatpush1.bf16.msra.mxu0 %v604
  %797 = vmatprep.subr.bf16.mxu0 0
  %798 = vmatpush2.bf16.msra.mxu0 %v619
  %799 = vmatprep.subr.bf16.mxu0 0
  %800 = vmatpush2.bf16.msra.mxu0 %v618
  %801 = vmatprep.subr.bf16.mxu0 0
  %802 = vmatpush2.bf16.msra.mxu0 %v617
  %803 = vmatprep.subr.bf16.mxu0 0
  %804 = vmatpush2.bf16.msra.mxu0 %v616
  %805 = vmatprep.subr.bf16.mxu0 0
  %806 = vmatpush2.bf16.msra.mxu0 %v615
  %807 = vmatprep.subr.bf16.mxu0 0
  %808 = vmatpush2.bf16.msra.mxu0 %v614
  %809 = vmatprep.subr.bf16.mxu0 0
  %810 = vmatpush2.bf16.msra.mxu0 %v613
  %811 = vmatprep.subr.bf16.mxu0 0
  %812 = vmatpush2.bf16.msra.mxu0 %v612
  %813 = vmatprep.mubr.bf16.mxu0 %v271
  %814 = vmatmul.mubr.bf16.gmra.mxu0 %v270
  %v815 = vpop.f32.mrf.mxu0
  %v816 = vadd.f32 %v751, %v815
  %v817 = vpop.f32.mrf.mxu0
  %v818 = vpop.f32.mrf.mxu0
  %v819 = vadd.f32 %v754, %v818
  %v820 = vpop.f32.mrf.mxu0
  %821 = vmatprep.mubr.bf16.mxu0 %v279
  %822 = vmatmul.mubr.bf16.gmra.mxu0 %v278
  %v823 = vpop.f32.mrf.mxu0
  %v824 = vadd.f32 %v759, %v823
  %v825 = vpop.f32.mrf.mxu0
  %v826 = vpop.f32.mrf.mxu0
  %v827 = vadd.f32 %v762, %v826
  %v828 = vpop.f32.mrf.mxu0
  %829 = vmatprep.mubr.bf16.mxu0 %v287
  %830 = vmatmul.mubr.bf16.gmra.mxu0 %v286
  %v831 = vpop.f32.mrf.mxu0
  %v832 = vadd.f32 %v767, %v831
  %v833 = vpop.f32.mrf.mxu0
  %v834 = vpop.f32.mrf.mxu0
  %v835 = vadd.f32 %v770, %v834
  %v836 = vpop.f32.mrf.mxu0
  %837 = vmatprep.mubr.bf16.mxu0 %v295
  %838 = vmatmul.mubr.bf16.gmra.mxu0 %v294
  %v839 = vpop.f32.mrf.mxu0
  %v840 = vadd.f32 %v775, %v839
  %v841 = vpop.f32.mrf.mxu0
  %v842 = vpop.f32.mrf.mxu0
  %v843 = vadd.f32 %v778, %v842
  %v844 = vpop.f32.mrf.mxu0
  %845 = vdwg.mxu0
  %846 = vmatprep.subr.bf16.mxu0 0
  %847 = vmatpush1.bf16.msra.mxu0 %v627
  %848 = vmatprep.subr.bf16.mxu0 0
  %849 = vmatpush1.bf16.msra.mxu0 %v626
  %850 = vmatprep.subr.bf16.mxu0 0
  %851 = vmatpush1.bf16.msra.mxu0 %v625
  %852 = vmatprep.subr.bf16.mxu0 0
  %853 = vmatpush1.bf16.msra.mxu0 %v624
  %854 = vmatprep.subr.bf16.mxu0 0
  %855 = vmatpush1.bf16.msra.mxu0 %v623
  %856 = vmatprep.subr.bf16.mxu0 0
  %857 = vmatpush1.bf16.msra.mxu0 %v622
  %858 = vmatprep.subr.bf16.mxu0 0
  %859 = vmatpush1.bf16.msra.mxu0 %v621
  %860 = vmatprep.subr.bf16.mxu0 0
  %861 = vmatpush1.bf16.msra.mxu0 %v620
  %862 = vmatprep.subr.bf16.mxu0 0
  %863 = vmatpush2.bf16.msra.mxu0 %v635
  %864 = vmatprep.subr.bf16.mxu0 0
  %865 = vmatpush2.bf16.msra.mxu0 %v634
  %866 = vmatprep.subr.bf16.mxu0 0
  %867 = vmatpush2.bf16.msra.mxu0 %v633
  %868 = vmatprep.subr.bf16.mxu0 0
  %869 = vmatpush2.bf16.msra.mxu0 %v632
  %870 = vmatprep.subr.bf16.mxu0 0
  %871 = vmatpush2.bf16.msra.mxu0 %v631
  %872 = vmatprep.subr.bf16.mxu0 0
  %873 = vmatpush2.bf16.msra.mxu0 %v630
  %874 = vmatprep.subr.bf16.mxu0 0
  %875 = vmatpush2.bf16.msra.mxu0 %v629
  %876 = vmatprep.subr.bf16.mxu0 0
  %877 = vmatpush2.bf16.msra.mxu0 %v628
  %878 = vmatprep.mubr.bf16.mxu0 %v273
  %879 = vmatmul.mubr.bf16.gmra.mxu0 %v272
  %v880 = vpop.f32.mrf.mxu0
  %v881 = vadd.f32 %v816, %v880
  %v882 = vpop.f32.mrf.mxu0
  %v883 = vpop.f32.mrf.mxu0
  %v884 = vadd.f32 %v819, %v883
  %v885 = vpop.f32.mrf.mxu0
  %886 = vmatprep.mubr.bf16.mxu0 %v281
  %887 = vmatmul.mubr.bf16.gmra.mxu0 %v280
  %v888 = vpop.f32.mrf.mxu0
  %v889 = vadd.f32 %v824, %v888
  %v890 = vpop.f32.mrf.mxu0
  %v891 = vpop.f32.mrf.mxu0
  %v892 = vadd.f32 %v827, %v891
  %v893 = vpop.f32.mrf.mxu0
  %894 = vmatprep.mubr.bf16.mxu0 %v289
  %895 = vmatmul.mubr.bf16.gmra.mxu0 %v288
  %v896 = vpop.f32.mrf.mxu0
  %v897 = vadd.f32 %v832, %v896
  %v898 = vpop.f32.mrf.mxu0
  %v899 = vpop.f32.mrf.mxu0
  %v900 = vadd.f32 %v835, %v899
  %v901 = vpop.f32.mrf.mxu0
  %902 = vmatprep.mubr.bf16.mxu0 %v297
  %903 = vmatmul.mubr.bf16.gmra.mxu0 %v296
  %v904 = vpop.f32.mrf.mxu0
  %v905 = vadd.f32 %v840, %v904
  %v906 = vpop.f32.mrf.mxu0
  %v907 = vpop.f32.mrf.mxu0
  %v908 = vadd.f32 %v843, %v907
  %v909 = vpop.f32.mrf.mxu0
  %910 = vdwg.mxu0
  %911 = vmatprep.subr.bf16.mxu0 0
  %912 = vmatpush1.bf16.msra.mxu0 %v643
  %913 = vmatprep.subr.bf16.mxu0 0
  %914 = vmatpush1.bf16.msra.mxu0 %v642
  %915 = vmatprep.subr.bf16.mxu0 0
  %916 = vmatpush1.bf16.msra.mxu0 %v641
  %917 = vmatprep.subr.bf16.mxu0 0
  %918 = vmatpush1.bf16.msra.mxu0 %v640
  %919 = vmatprep.subr.bf16.mxu0 0
  %920 = vmatpush1.bf16.msra.mxu0 %v639
  %921 = vmatprep.subr.bf16.mxu0 0
  %922 = vmatpush1.bf16.msra.mxu0 %v638
  %923 = vmatprep.subr.bf16.mxu0 0
  %924 = vmatpush1.bf16.msra.mxu0 %v637
  %925 = vmatprep.subr.bf16.mxu0 0
  %926 = vmatpush1.bf16.msra.mxu0 %v636
  %927 = vmatprep.subr.bf16.mxu0 0
  %928 = vmatpush2.bf16.msra.mxu0 %v651
  %929 = vmatprep.subr.bf16.mxu0 0
  %930 = vmatpush2.bf16.msra.mxu0 %v650
  %931 = vmatprep.subr.bf16.mxu0 0
  %932 = vmatpush2.bf16.msra.mxu0 %v649
  %933 = vmatprep.subr.bf16.mxu0 0
  %934 = vmatpush2.bf16.msra.mxu0 %v648
  %935 = vmatprep.subr.bf16.mxu0 0
  %936 = vmatpush2.bf16.msra.mxu0 %v647
  %937 = vmatprep.subr.bf16.mxu0 0
  %938 = vmatpush2.bf16.msra.mxu0 %v646
  %939 = vmatprep.subr.bf16.mxu0 0
  %940 = vmatpush2.bf16.msra.mxu0 %v645
  %941 = vmatprep.subr.bf16.mxu0 0
  %942 = vmatpush2.bf16.msra.mxu0 %v644
  %943 = vmatprep.mubr.bf16.mxu0 %v275
  %944 = vmatmul.mubr.bf16.gmra.mxu0 %v274
  %v945 = vpop.f32.mrf.mxu0
  %v946 = vadd.f32 %v881, %v945
  %v947 = vpop.f32.mrf.mxu0
  %v948 = vpop.f32.mrf.mxu0
  %v949 = vadd.f32 %v884, %v948
  %v950 = vpop.f32.mrf.mxu0
  %951 = vmatprep.mubr.bf16.mxu0 %v283
  %952 = vmatmul.mubr.bf16.gmra.mxu0 %v282
  %v953 = vpop.f32.mrf.mxu0
  %v954 = vadd.f32 %v889, %v953
  %v955 = vpop.f32.mrf.mxu0
  %v956 = vpop.f32.mrf.mxu0
  %v957 = vadd.f32 %v892, %v956
  %v958 = vpop.f32.mrf.mxu0
  %959 = vmatprep.mubr.bf16.mxu0 %v291
  %960 = vmatmul.mubr.bf16.gmra.mxu0 %v290
  %v961 = vpop.f32.mrf.mxu0
  %v962 = vadd.f32 %v897, %v961
  %v963 = vpop.f32.mrf.mxu0
  %v964 = vpop.f32.mrf.mxu0
  %v965 = vadd.f32 %v900, %v964
  %v966 = vpop.f32.mrf.mxu0
  %967 = vmatprep.mubr.bf16.mxu0 %v299
  %968 = vmatmul.mubr.bf16.gmra.mxu0 %v298
  %v969 = vpop.f32.mrf.mxu0
  %v970 = vadd.f32 %v905, %v969
  %v971 = vpop.f32.mrf.mxu0
  %v972 = vpop.f32.mrf.mxu0
  %v973 = vadd.f32 %v908, %v972
  %v974 = vpop.f32.mrf.mxu0
  %975 = vdwg.mxu0
  %976 = vst [vmem:[%s2] sm:$0xff] %v946
  %977 = vst [vmem:[%s2 + $0x8] sm:$0xff] %v949
  %978 = vst [vmem:[%s2 + $0x10] sm:$0xff] %v954
  %979 = vst [vmem:[%s2 + $0x18] sm:$0xff] %v957
  %980 = vst [vmem:[%s2 + $0x20] sm:$0xff] %v962
  %981 = vst [vmem:[%s2 + $0x28] sm:$0xff] %v965
  %982 = vst [vmem:[%s2 + $0x30] sm:$0xff] %v970
  %983 = vst [vmem:[%s2 + $0x38] sm:$0xff] %v973
  // Predicated region
  $region10: #{encoder_forward.10} parent=0 // pred_check
    _
  $region11: #{encoder_forward.10} parent=0 // pred_check_branch
    %985 = sbr.rel (0) target = $region13
  $region12: #{encoder_forward.10} parent=0 // pred_region
    _
  $region13: #{encoder_forward.10} parent=0 // pred_fallthru
    _
  // Predicated region
  $region14: #{encoder_forward.10} parent=0 // pred_check
    _
  $region15: #{encoder_forward.10} parent=0 // pred_check_branch
    %987 = sbr.rel (0) target = $region17
  $region16: #{encoder_forward.10} parent=0 // pred_region
    _
  $region17: #{encoder_forward.10} parent=0 // pred_fallthru
    _

</llo_original>
